<compile_context>
chip_gen: v7x
topology: tpu7x:2x2x1
jax: 0.10.0
libtpu: 0.0.40
codegen_flags: <defaults>
</compile_context>

<pallas_src>
import math
import functools

import numpy as np
import jax
import jax.numpy as jnp
from jax.experimental import pallas as pl
from jax.experimental.pallas import tpu as pltpu


# ----------------------------------------------------------------------------
# In-kernel helpers (traced inside the Pallas kernel body)
# ----------------------------------------------------------------------------
def _norm(x, alpha, bias, eps=1e-6):
    # PyTorch `Norm`: alpha * (x - mean) / (std + eps) + bias,
    # std is the *unbiased* estimator (divisor D-1), eps added to std.
    d_model = x.shape[-1]
    mean = jnp.mean(x, axis=-1, keepdims=True)
    diff = x - mean
    var = jnp.sum(diff * diff, axis=-1, keepdims=True) * (1.0 / (d_model - 1))
    std = jnp.sqrt(var)
    return alpha * diff * pl.reciprocal(std + eps, approx=True) + bias


def _mha(x2, wqkv, bqkv, wo, bo, mask, heads):
    # wqkv: (D, 3D) bf16  [Wq | Wk | Wv],  wo: (D, D) bf16
    # bqkv: (1, 3D) f32,  bo: (1, D) f32,  mask: (1, S) broadcast over scores
    S, D = x2.shape
    dk = D // heads
    scale = 1.0 / math.sqrt(dk)

    # Fused QKV projection: one fat matmul (K=D, N=3D) instead of 3.
    qkv = jnp.dot(x2.astype(jnp.bfloat16), wqkv,
                  preferred_element_type=jnp.float32) + bqkv      # (S, 3D) f32

    # TODO(synk): for large S switch to an online-softmax (flash) formulation
    # over K/V tiles and keep dk off the lane axis; full-sequence scores are
    # fine at these demo shapes.
    head_outs = []
    for h in range(heads):  # static unroll
        qh = qkv[:, h * dk:(h + 1) * dk].astype(jnp.bfloat16)
        kh = qkv[:, D + h * dk:D + (h + 1) * dk].astype(jnp.bfloat16)
        vh = qkv[:, 2 * D + h * dk:2 * D + (h + 1) * dk].astype(jnp.bfloat16)
        s = jnp.dot(qh, kh.T, preferred_element_type=jnp.float32) * scale
        s = jnp.where(mask == 0, -1e9, s)
        s = s - jnp.max(s, axis=-1, keepdims=True)
        e = jnp.exp(s)
        p = e * pl.reciprocal(jnp.sum(e, axis=-1, keepdims=True), approx=True)
        head_outs.append(jnp.dot(p.astype(jnp.bfloat16), vh,
                                 preferred_element_type=jnp.float32))  # (S, dk)

    concat = jnp.concatenate(head_outs, axis=-1)                   # (S, D)
    # Single output projection (K=D) instead of `heads` K=dk matmuls.
    return jnp.dot(concat.astype(jnp.bfloat16), wo,
                   preferred_element_type=jnp.float32) + bo


# ----------------------------------------------------------------------------
# Fused Encoder kernel: grid = (batch, layer); x resident in VMEM scratch
# ----------------------------------------------------------------------------
def encoder_kernel(x_ref, mask_ref, na_ref, nb_ref,
                   wqkv_ref, bqkv_ref, wo_ref, bo_ref,
                   w1_ref, b1_ref, w2_ref, b2_ref,
                   fa_ref, fb_ref,
                   out_ref, x_scr, *, heads):
    l = pl.program_id(1)

    @pl.when(l == 0)
    def _():
        x_scr[...] = x_ref[0]                       # load embedded input once

    x = x_scr[...]                                  # (S, D) f32
    mask = mask_ref[0]                              # (1, S)
    na = na_ref[0]                                  # (2, D)
    nb = nb_ref[0]                                  # (2, D)

    # --- self-attention sublayer (dropout = identity in eval mode) ---
    x2 = _norm(x, na[0:1, :], nb[0:1, :])
    x = x + _mha(x2, wqkv_ref[0], bqkv_ref[0], wo_ref[0], bo_ref[0],
                 mask, heads)

    # --- feed-forward sublayer ---
    x2 = _norm(x, na[1:2, :], nb[1:2, :])
    h = jnp.maximum(
        jnp.dot(x2.astype(jnp.bfloat16), w1_ref[0],
                preferred_element_type=jnp.float32) + b1_ref[0], 0.0)
    x = x + jnp.dot(h.astype(jnp.bfloat16), w2_ref[0],
                    preferred_element_type=jnp.float32) + b2_ref[0]

    x_scr[...] = x

    # Final Norm fused into the last layer iteration; single HBM writeback.
    @pl.when(l == pl.num_programs(1) - 1)
    def _():
        out_ref[0] = _norm(x, fa_ref[...], fb_ref[...])


# ----------------------------------------------------------------------------
# pallas_call wrapper (single fused call for the whole encoder stack)
# ----------------------------------------------------------------------------
def encoder_forward(src, mask, params, *, heads):
    D = params["embed"].shape[1]
    B, S = src.shape
    N = params["wqkv"].shape[0]

    # Embedder + PositionalEncoder (dropout = identity in eval mode)
    x = params["embed"][src].astype(jnp.float32) * math.sqrt(D)
    x = x + params["pe"][:S][None, :, :]
    x = x.astype(jnp.float32)

    def layer_spec(arr):        # stacked (N, ...) weight, pick block l
        shp = arr.shape
        blk = (1,) + tuple(shp[1:])
        nd = len(shp)
        return pl.BlockSpec(blk, lambda b, l, _n=nd: (l,) + (0,) * (_n - 1))

    def rep_spec(arr):          # shared (final norm) parameter
        nd = arr.ndim
        return pl.BlockSpec(tuple(arr.shape), lambda b, l, _n=nd: (0,) * _n)

    in_specs = [
        pl.BlockSpec((1, S, D), lambda b, l: (b, 0, 0)),      # x (resident)
        pl.BlockSpec((1, 1, S), lambda b, l: (b, 0, 0)),      # mask
        layer_spec(params["norm_a"]), layer_spec(params["norm_b"]),
        layer_spec(params["wqkv"]),   layer_spec(params["bqkv"]),
        layer_spec(params["wo"]),     layer_spec(params["bo"]),
        layer_spec(params["w1"]),     layer_spec(params["b1"]),
        layer_spec(params["w2"]),     layer_spec(params["b2"]),
        rep_spec(params["final_a"]),  rep_spec(params["final_b"]),
    ]

    return pl.pallas_call(
        functools.partial(encoder_kernel, heads=heads),
        grid=(B, N),
        in_specs=in_specs,
        out_specs=pl.BlockSpec((1, S, D), lambda b, l: (b, 0, 0)),
        out_shape=jax.ShapeDtypeStruct((B, S, D), jnp.float32),
        scratch_shapes=[pltpu.VMEM((S, D), jnp.float32)],
        compiler_params=pltpu.CompilerParams(
            dimension_semantics=("parallel", "arbitrary")),
    )(x, mask,
      params["norm_a"], params["norm_b"],
      params["wqkv"], params["bqkv"], params["wo"], params["bo"],
      params["w1"], params["b1"], params["w2"], params["b2"],
      params["final_a"], params["final_b"])


# ----------------------------------------------------------------------------
# Deterministic parameter construction
# ----------------------------------------------------------------------------
def make_pe_table(max_seq_len, d_model):
    # Exactly reproduces the PositionalEncoder buffer (note the 2*(i+1) for cos).
    pe = np.zeros((max_seq_len, d_model), dtype=np.float32)
    for pos in range(max_seq_len):
        for i in range(0, d_model, 2):
            pe[pos, i] = math.sin(pos / (10000 ** ((2 * i) / d_model)))
            pe[pos, i + 1] = math.cos(pos / (10000 ** ((2 * (i + 1)) / d_model)))
    return jnp.asarray(pe)


def init_params(key, vocab_size, d_model, d_ff, N, max_seq_len=64):
    ks = jax.random.split(key, 8)

    def nrm(k, shape, scale=0.02):
        return jax.random.normal(k, shape, jnp.float32) * scale

    embed = jax.random.normal(ks[0], (vocab_size, d_model), jnp.float32)

    # get_clones uses deepcopy -> all N layers start from identical weights;
    # stacked along a leading layer axis so one pallas_call walks the stack.
    wq = nrm(ks[1], (d_model, d_model))
    wk = nrm(ks[2], (d_model, d_model))
    wv = nrm(ks[3], (d_model, d_model))
    wqkv = jnp.concatenate([wq, wk, wv], axis=1)              # (D, 3D)
    wo = nrm(ks[4], (d_model, d_model))
    w1 = nrm(ks[5], (d_model, d_ff))
    w2 = nrm(ks[6], (d_ff, d_model))

    def stack(a):
        return jnp.broadcast_to(a[None], (N,) + a.shape)

    return dict(
        embed=embed,
        pe=make_pe_table(max_seq_len, d_model),
        norm_a=stack(jnp.ones((2, d_model), jnp.float32)),
        norm_b=stack(jnp.zeros((2, d_model), jnp.float32)),
        # MXU operands stored in bf16 (halves weight DMA + VMEM), biases f32.
        wqkv=stack(wqkv.astype(jnp.bfloat16)),
        bqkv=stack(jnp.zeros((1, 3 * d_model), jnp.float32)),
        wo=stack(wo.astype(jnp.bfloat16)),
        bo=stack(jnp.zeros((1, d_model), jnp.float32)),
        w1=stack(w1.astype(jnp.bfloat16)),
        b1=stack(jnp.zeros((1, d_ff), jnp.float32)),
        w2=stack(w2.astype(jnp.bfloat16)),
        b2=stack(jnp.zeros((1, d_model), jnp.float32)),
        final_a=jnp.ones((1, d_model), jnp.float32),
        final_b=jnp.zeros((1, d_model), jnp.float32),
    )


# ----------------------------------------------------------------------------
# Demo
# ----------------------------------------------------------------------------
if __name__ == "__main__":
    vocab_size, d_model, N, heads = 100, 32, 2, 4
    d_ff = 64  # small d_ff for the synthetic demo (PyTorch default is 2048)
    B, S = 2, 8

    key = jax.random.PRNGKey(0)
    k_par, k_src = jax.random.split(key)

    params = init_params(k_par, vocab_size, d_model, d_ff, N)

    src = jax.random.randint(k_src, (B, S), 1, vocab_size, dtype=jnp.int32)
    # Padding mask (B, 1, S): last two positions of batch 1 are padding.
    mask = jnp.ones((B, 1, S), jnp.float32).at[1, 0, S - 2:].set(0.0)

    out = encoder_forward(src, mask, params, heads=heads)
    out = jax.block_until_ready(out)
    assert out.shape == (B, S, d_model) and out.dtype == jnp.float32
    assert bool(jnp.all(jnp.isfinite(out)))
    print("KERNEL_OK")
</pallas_src>

<mosaic_0001>
module attributes {stable_mosaic.version = 11 : i64} {
  func.func @encoder_kernel(%arg0: i32, %arg1: i32, %arg2: memref<1x8x32xf32, #tpu.memory_space<vmem>>, %arg3: memref<1x1x8xf32, #tpu.memory_space<vmem>>, %arg4: memref<1x2x32xf32, #tpu.memory_space<vmem>>, %arg5: memref<1x2x32xf32, #tpu.memory_space<vmem>>, %arg6: memref<1x32x96xbf16, #tpu.memory_space<vmem>>, %arg7: memref<1x1x96xf32, #tpu.memory_space<vmem>>, %arg8: memref<1x32x32xbf16, #tpu.memory_space<vmem>>, %arg9: memref<1x1x32xf32, #tpu.memory_space<vmem>>, %arg10: memref<1x32x64xbf16, #tpu.memory_space<vmem>>, %arg11: memref<1x1x64xf32, #tpu.memory_space<vmem>>, %arg12: memref<1x64x32xbf16, #tpu.memory_space<vmem>>, %arg13: memref<1x1x32xf32, #tpu.memory_space<vmem>>, %arg14: memref<1x32xf32, #tpu.memory_space<vmem>>, %arg15: memref<1x32xf32, #tpu.memory_space<vmem>>, %arg16: memref<1x8x32xf32, #tpu.memory_space<vmem>>, %arg17: memref<8x32xf32, #tpu.memory_space<vmem>>) attributes {dimension_semantics = [#tpu.dimension_semantics<parallel>, #tpu.dimension_semantics<arbitrary>], iteration_bounds = array<i64: 2, 2>, scalar_prefetch = 0 : i64, scratch_operands = 1 : i64, tpu.core_type = #tpu.core_type<tc>, window_params = [{transform_indices = @transform_0, window_bounds = array<i64: 1, 8, 32>}, {transform_indices = @transform_1, window_bounds = array<i64: 1, 1, 8>}, {transform_indices = @transform_2, window_bounds = array<i64: 1, 2, 32>}, {transform_indices = @transform_3, window_bounds = array<i64: 1, 2, 32>}, {transform_indices = @transform_4, window_bounds = array<i64: 1, 32, 96>}, {transform_indices = @transform_5, window_bounds = array<i64: 1, 1, 96>}, {transform_indices = @transform_6, window_bounds = array<i64: 1, 32, 32>}, {transform_indices = @transform_7, window_bounds = array<i64: 1, 1, 32>}, {transform_indices = @transform_8, window_bounds = array<i64: 1, 32, 64>}, {transform_indices = @transform_9, window_bounds = array<i64: 1, 1, 64>}, {transform_indices = @transform_10, window_bounds = array<i64: 1, 64, 32>}, {transform_indices = @transform_11, window_bounds = array<i64: 1, 1, 32>}, {pipeline_mode = #tpu.pipeline_mode<synchronous>, transform_indices = @transform_12, window_bounds = array<i64: 1, 32>}, {pipeline_mode = #tpu.pipeline_mode<synchronous>, transform_indices = @transform_13, window_bounds = array<i64: 1, 32>}, {transform_indices = @transform_14, window_bounds = array<i64: 1, 8, 32>}]} {
    %c0_i32 = arith.constant 0 : i32
    %0 = arith.cmpi eq, %arg1, %c0_i32 : i32
    %1 = arith.extui %0 : i1 to i32
    %c0_i32_0 = arith.constant 0 : i32
    %2 = arith.cmpi ne, %1, %c0_i32_0 : i32
    scf.if %2 {
      %c0_80 = arith.constant 0 : index
      %c0_81 = arith.constant 0 : index
      %c0_82 = arith.constant 0 : index
      %209 = vector.load %arg2[%c0_80, %c0_81, %c0_82] : memref<1x8x32xf32, #tpu.memory_space<vmem>>, vector<1x8x32xf32>
      %210 = vector.shape_cast %209 : vector<1x8x32xf32> to vector<8x32xf32>
      %c0_83 = arith.constant 0 : index
      %c0_84 = arith.constant 0 : index
      %211 = vector.load %arg17[%c0_83, %c0_84] : memref<8x32xf32, #tpu.memory_space<vmem>>, vector<8x32xf32>
      tpu.vector_store %arg17[%c0_83, %c0_84], %210 {strides = array<i32>} : memref<8x32xf32, #tpu.memory_space<vmem>>, vector<8x32xf32>,
    } else {
    }
    %c0 = arith.constant 0 : index
    %c0_1 = arith.constant 0 : index
    %3 = vector.load %arg17[%c0, %c0_1] : memref<8x32xf32, #tpu.memory_space<vmem>>, vector<8x32xf32>
    %c0_2 = arith.constant 0 : index
    %c0_3 = arith.constant 0 : index
    %c0_4 = arith.constant 0 : index
    %4 = vector.load %arg3[%c0_2, %c0_3, %c0_4] : memref<1x1x8xf32, #tpu.memory_space<vmem>>, vector<1x1x8xf32>
    %5 = vector.shape_cast %4 : vector<1x1x8xf32> to vector<1x8xf32>
    %c0_5 = arith.constant 0 : index
    %c0_6 = arith.constant 0 : index
    %c0_7 = arith.constant 0 : index
    %6 = vector.load %arg4[%c0_5, %c0_6, %c0_7] : memref<1x2x32xf32, #tpu.memory_space<vmem>>, vector<1x2x32xf32>
    %7 = vector.shape_cast %6 : vector<1x2x32xf32> to vector<2x32xf32>
    %c0_8 = arith.constant 0 : index
    %c0_9 = arith.constant 0 : index
    %c0_10 = arith.constant 0 : index
    %8 = vector.load %arg5[%c0_8, %c0_9, %c0_10] : memref<1x2x32xf32, #tpu.memory_space<vmem>>, vector<1x2x32xf32>
    %9 = vector.shape_cast %8 : vector<1x2x32xf32> to vector<2x32xf32>
    %10 = vector.extract_strided_slice %7 {offsets = [0, 0], sizes = [1, 32], strides = [1, 1]} : vector<2x32xf32> to vector<1x32xf32>
    %11 = vector.extract_strided_slice %9 {offsets = [0, 0], sizes = [1, 32], strides = [1, 1]} : vector<2x32xf32> to vector<1x32xf32>
    %cst = arith.constant dense<0.000000e+00> : vector<8xf32>
    %12 = vector.multi_reduction <add>, %3, %cst [1] : vector<8x32xf32> to vector<8xf32>
    %13 = vector.shape_cast %12 : vector<8xf32> to vector<8x1xf32>
    %cst_11 = arith.constant 3.200000e+01 : f32
    %14 = vector.broadcast %cst_11 : f32 to vector<8x1xf32>
    %15 = arith.divf %13, %14 : vector<8x1xf32>
    %16 = vector.broadcast %15 : vector<8x1xf32> to vector<8x32xf32>
    %17 = arith.subf %3, %16 : vector<8x32xf32>
    %18 = arith.mulf %17, %17 : vector<8x32xf32>
    %cst_12 = arith.constant dense<0.000000e+00> : vector<8xf32>
    %19 = vector.multi_reduction <add>, %18, %cst_12 [1] : vector<8x32xf32> to vector<8xf32>
    %20 = vector.shape_cast %19 : vector<8xf32> to vector<8x1xf32>
    %cst_13 = arith.constant 0.0322580636 : f32
    %21 = vector.broadcast %cst_13 : f32 to vector<8x1xf32>
    %22 = arith.mulf %20, %21 : vector<8x1xf32>
    %23 = math.sqrt %22 : vector<8x1xf32>
    %24 = vector.broadcast %10 : vector<1x32xf32> to vector<8x32xf32>
    %25 = arith.mulf %24, %17 : vector<8x32xf32>
    %cst_14 = arith.constant 9.99999997E-7 : f32
    %26 = vector.broadcast %cst_14 : f32 to vector<8x1xf32>
    %27 = arith.addf %23, %26 : vector<8x1xf32>
    %28 = tpu.reciprocal %27 {approx = true} : vector<8x1xf32> -> vector<8x1xf32>
    %29 = vector.broadcast %28 : vector<8x1xf32> to vector<8x32xf32>
    %30 = arith.mulf %25, %29 : vector<8x32xf32>
    %31 = vector.broadcast %11 : vector<1x32xf32> to vector<8x32xf32>
    %32 = arith.addf %30, %31 : vector<8x32xf32>
    %c0_15 = arith.constant 0 : index
    %c0_16 = arith.constant 0 : index
    %c0_17 = arith.constant 0 : index
    %33 = vector.load %arg6[%c0_15, %c0_16, %c0_17] : memref<1x32x96xbf16, #tpu.memory_space<vmem>>, vector<1x32x96xbf16>
    %34 = vector.shape_cast %33 : vector<1x32x96xbf16> to vector<32x96xbf16>
    %c0_18 = arith.constant 0 : index
    %c0_19 = arith.constant 0 : index
    %c0_20 = arith.constant 0 : index
    %35 = vector.load %arg7[%c0_18, %c0_19, %c0_20] : memref<1x1x96xf32, #tpu.memory_space<vmem>>, vector<1x1x96xf32>
    %36 = vector.shape_cast %35 : vector<1x1x96xf32> to vector<1x96xf32>
    %c0_21 = arith.constant 0 : index
    %c0_22 = arith.constant 0 : index
    %c0_23 = arith.constant 0 : index
    %37 = vector.load %arg8[%c0_21, %c0_22, %c0_23] : memref<1x32x32xbf16, #tpu.memory_space<vmem>>, vector<1x32x32xbf16>
    %38 = vector.shape_cast %37 : vector<1x32x32xbf16> to vector<32x32xbf16>
    %c0_24 = arith.constant 0 : index
    %c0_25 = arith.constant 0 : index
    %c0_26 = arith.constant 0 : index
    %39 = vector.load %arg9[%c0_24, %c0_25, %c0_26] : memref<1x1x32xf32, #tpu.memory_space<vmem>>, vector<1x1x32xf32>
    %40 = vector.shape_cast %39 : vector<1x1x32xf32> to vector<1x32xf32>
    %41 = arith.truncf %32 : vector<8x32xf32> to vector<8x32xbf16>
    %cst_27 = arith.constant dense<0.000000e+00> : vector<8x96xf32>
    %42 = tpu.matmul %41, %34, %cst_27 {dimension_numbers = #tpu.dot_dimension_numbers<[1], [0], [0], [1], [0, 0, 1, 1], [], []>} : vector<8x32xbf16>, vector<32x96xbf16>, vector<8x96xf32> -> vector<8x96xf32>
    %43 = vector.broadcast %36 : vector<1x96xf32> to vector<8x96xf32>
    %44 = arith.addf %42, %43 : vector<8x96xf32>
    %45 = vector.extract_strided_slice %44 {offsets = [0, 0], sizes = [8, 8], strides = [1, 1]} : vector<8x96xf32> to vector<8x8xf32>
    %46 = arith.truncf %45 : vector<8x8xf32> to vector<8x8xbf16>
    %47 = vector.extract_strided_slice %44 {offsets = [0, 32], sizes = [8, 8], strides = [1, 1]} : vector<8x96xf32> to vector<8x8xf32>
    %48 = arith.truncf %47 : vector<8x8xf32> to vector<8x8xbf16>
    %49 = vector.extract_strided_slice %44 {offsets = [0, 64], sizes = [8, 8], strides = [1, 1]} : vector<8x96xf32> to vector<8x8xf32>
    %50 = arith.truncf %49 : vector<8x8xf32> to vector<8x8xbf16>
    %51 = tpu.transpose %48, [1, 0] : vector<8x8xbf16> -> vector<8x8xbf16>
    %cst_28 = arith.constant dense<0.000000e+00> : vector<8x8xf32>
    %52 = tpu.matmul %46, %51, %cst_28 {dimension_numbers = #tpu.dot_dimension_numbers<[1], [0], [0], [1], [0, 0, 1, 1], [], []>} : vector<8x8xbf16>, vector<8x8xbf16>, vector<8x8xf32> -> vector<8x8xf32>
    %cst_29 = arith.constant 0.353553385 : f32
    %53 = vector.broadcast %cst_29 : f32 to vector<8x8xf32>
    %54 = arith.mulf %52, %53 : vector<8x8xf32>
    %cst_30 = arith.constant 0.000000e+00 : f32
    %55 = vector.broadcast %cst_30 : f32 to vector<1x8xf32>
    %56 = arith.cmpf oeq, %5, %55 : vector<1x8xf32>
    %cst_31 = arith.constant -1.000000e+09 : f32
    %57 = vector.shape_cast %56 : vector<1x8xi1> to vector<1x8xi1>
    %58 = vector.broadcast %57 : vector<1x8xi1> to vector<8x8xi1>
    %59 = vector.broadcast %cst_31 : f32 to vector<8x8xf32>
    %60 = arith.select %58, %59, %54 : vector<8x8xi1>, vector<8x8xf32>
    %cst_32 = arith.constant dense<0xFF800000> : vector<8xf32>
    %61 = vector.multi_reduction <maximumf>, %60, %cst_32 [1] : vector<8x8xf32> to vector<8xf32>
    %62 = vector.shape_cast %61 : vector<8xf32> to vector<8x1xf32>
    %63 = vector.broadcast %62 : vector<8x1xf32> to vector<8x8xf32>
    %64 = arith.subf %60, %63 : vector<8x8xf32>
    %65 = math.exp %64 : vector<8x8xf32>
    %cst_33 = arith.constant dense<0.000000e+00> : vector<8xf32>
    %66 = vector.multi_reduction <add>, %65, %cst_33 [1] : vector<8x8xf32> to vector<8xf32>
    %67 = vector.shape_cast %66 : vector<8xf32> to vector<8x1xf32>
    %68 = tpu.reciprocal %67 {approx = true} : vector<8x1xf32> -> vector<8x1xf32>
    %69 = vector.broadcast %68 : vector<8x1xf32> to vector<8x8xf32>
    %70 = arith.mulf %65, %69 : vector<8x8xf32>
    %71 = arith.truncf %70 : vector<8x8xf32> to vector<8x8xbf16>
    %cst_34 = arith.constant dense<0.000000e+00> : vector<8x8xf32>
    %72 = tpu.matmul %71, %50, %cst_34 {dimension_numbers = #tpu.dot_dimension_numbers<[1], [0], [0], [1], [0, 0, 1, 1], [], []>} : vector<8x8xbf16>, vector<8x8xbf16>, vector<8x8xf32> -> vector<8x8xf32>
    %73 = vector.extract_strided_slice %44 {offsets = [0, 8], sizes = [8, 8], strides = [1, 1]} : vector<8x96xf32> to vector<8x8xf32>
    %74 = arith.truncf %73 : vector<8x8xf32> to vector<8x8xbf16>
    %75 = vector.extract_strided_slice %44 {offsets = [0, 40], sizes = [8, 8], strides = [1, 1]} : vector<8x96xf32> to vector<8x8xf32>
    %76 = arith.truncf %75 : vector<8x8xf32> to vector<8x8xbf16>
    %77 = vector.extract_strided_slice %44 {offsets = [0, 72], sizes = [8, 8], strides = [1, 1]} : vector<8x96xf32> to vector<8x8xf32>
    %78 = arith.truncf %77 : vector<8x8xf32> to vector<8x8xbf16>
    %79 = tpu.transpose %76, [1, 0] : vector<8x8xbf16> -> vector<8x8xbf16>
    %cst_35 = arith.constant dense<0.000000e+00> : vector<8x8xf32>
    %80 = tpu.matmul %74, %79, %cst_35 {dimension_numbers = #tpu.dot_dimension_numbers<[1], [0], [0], [1], [0, 0, 1, 1], [], []>} : vector<8x8xbf16>, vector<8x8xbf16>, vector<8x8xf32> -> vector<8x8xf32>
    %cst_36 = arith.constant 0.353553385 : f32
    %81 = vector.broadcast %cst_36 : f32 to vector<8x8xf32>
    %82 = arith.mulf %80, %81 : vector<8x8xf32>
    %cst_37 = arith.constant 0.000000e+00 : f32
    %83 = vector.broadcast %cst_37 : f32 to vector<1x8xf32>
    %84 = arith.cmpf oeq, %5, %83 : vector<1x8xf32>
    %cst_38 = arith.constant -1.000000e+09 : f32
    %85 = vector.shape_cast %84 : vector<1x8xi1> to vector<1x8xi1>
    %86 = vector.broadcast %85 : vector<1x8xi1> to vector<8x8xi1>
    %87 = vector.broadcast %cst_38 : f32 to vector<8x8xf32>
    %88 = arith.select %86, %87, %82 : vector<8x8xi1>, vector<8x8xf32>
    %cst_39 = arith.constant dense<0xFF800000> : vector<8xf32>
    %89 = vector.multi_reduction <maximumf>, %88, %cst_39 [1] : vector<8x8xf32> to vector<8xf32>
    %90 = vector.shape_cast %89 : vector<8xf32> to vector<8x1xf32>
    %91 = vector.broadcast %90 : vector<8x1xf32> to vector<8x8xf32>
    %92 = arith.subf %88, %91 : vector<8x8xf32>
    %93 = math.exp %92 : vector<8x8xf32>
    %cst_40 = arith.constant dense<0.000000e+00> : vector<8xf32>
    %94 = vector.multi_reduction <add>, %93, %cst_40 [1] : vector<8x8xf32> to vector<8xf32>
    %95 = vector.shape_cast %94 : vector<8xf32> to vector<8x1xf32>
    %96 = tpu.reciprocal %95 {approx = true} : vector<8x1xf32> -> vector<8x1xf32>
    %97 = vector.broadcast %96 : vector<8x1xf32> to vector<8x8xf32>
    %98 = arith.mulf %93, %97 : vector<8x8xf32>
    %99 = arith.truncf %98 : vector<8x8xf32> to vector<8x8xbf16>
    %cst_41 = arith.constant dense<0.000000e+00> : vector<8x8xf32>
    %100 = tpu.matmul %99, %78, %cst_41 {dimension_numbers = #tpu.dot_dimension_numbers<[1], [0], [0], [1], [0, 0, 1, 1], [], []>} : vector<8x8xbf16>, vector<8x8xbf16>, vector<8x8xf32> -> vector<8x8xf32>
    %101 = vector.extract_strided_slice %44 {offsets = [0, 16], sizes = [8, 8], strides = [1, 1]} : vector<8x96xf32> to vector<8x8xf32>
    %102 = arith.truncf %101 : vector<8x8xf32> to vector<8x8xbf16>
    %103 = vector.extract_strided_slice %44 {offsets = [0, 48], sizes = [8, 8], strides = [1, 1]} : vector<8x96xf32> to vector<8x8xf32>
    %104 = arith.truncf %103 : vector<8x8xf32> to vector<8x8xbf16>
    %105 = vector.extract_strided_slice %44 {offsets = [0, 80], sizes = [8, 8], strides = [1, 1]} : vector<8x96xf32> to vector<8x8xf32>
    %106 = arith.truncf %105 : vector<8x8xf32> to vector<8x8xbf16>
    %107 = tpu.transpose %104, [1, 0] : vector<8x8xbf16> -> vector<8x8xbf16>
    %cst_42 = arith.constant dense<0.000000e+00> : vector<8x8xf32>
    %108 = tpu.matmul %102, %107, %cst_42 {dimension_numbers = #tpu.dot_dimension_numbers<[1], [0], [0], [1], [0, 0, 1, 1], [], []>} : vector<8x8xbf16>, vector<8x8xbf16>, vector<8x8xf32> -> vector<8x8xf32>
    %cst_43 = arith.constant 0.353553385 : f32
    %109 = vector.broadcast %cst_43 : f32 to vector<8x8xf32>
    %110 = arith.mulf %108, %109 : vector<8x8xf32>
    %cst_44 = arith.constant 0.000000e+00 : f32
    %111 = vector.broadcast %cst_44 : f32 to vector<1x8xf32>
    %112 = arith.cmpf oeq, %5, %111 : vector<1x8xf32>
    %cst_45 = arith.constant -1.000000e+09 : f32
    %113 = vector.shape_cast %112 : vector<1x8xi1> to vector<1x8xi1>
    %114 = vector.broadcast %113 : vector<1x8xi1> to vector<8x8xi1>
    %115 = vector.broadcast %cst_45 : f32 to vector<8x8xf32>
    %116 = arith.select %114, %115, %110 : vector<8x8xi1>, vector<8x8xf32>
    %cst_46 = arith.constant dense<0xFF800000> : vector<8xf32>
    %117 = vector.multi_reduction <maximumf>, %116, %cst_46 [1] : vector<8x8xf32> to vector<8xf32>
    %118 = vector.shape_cast %117 : vector<8xf32> to vector<8x1xf32>
    %119 = vector.broadcast %118 : vector<8x1xf32> to vector<8x8xf32>
    %120 = arith.subf %116, %119 : vector<8x8xf32>
    %121 = math.exp %120 : vector<8x8xf32>
    %cst_47 = arith.constant dense<0.000000e+00> : vector<8xf32>
    %122 = vector.multi_reduction <add>, %121, %cst_47 [1] : vector<8x8xf32> to vector<8xf32>
    %123 = vector.shape_cast %122 : vector<8xf32> to vector<8x1xf32>
    %124 = tpu.reciprocal %123 {approx = true} : vector<8x1xf32> -> vector<8x1xf32>
    %125 = vector.broadcast %124 : vector<8x1xf32> to vector<8x8xf32>
    %126 = arith.mulf %121, %125 : vector<8x8xf32>
    %127 = arith.truncf %126 : vector<8x8xf32> to vector<8x8xbf16>
    %cst_48 = arith.constant dense<0.000000e+00> : vector<8x8xf32>
    %128 = tpu.matmul %127, %106, %cst_48 {dimension_numbers = #tpu.dot_dimension_numbers<[1], [0], [0], [1], [0, 0, 1, 1], [], []>} : vector<8x8xbf16>, vector<8x8xbf16>, vector<8x8xf32> -> vector<8x8xf32>
    %129 = vector.extract_strided_slice %44 {offsets = [0, 24], sizes = [8, 8], strides = [1, 1]} : vector<8x96xf32> to vector<8x8xf32>
    %130 = arith.truncf %129 : vector<8x8xf32> to vector<8x8xbf16>
    %131 = vector.extract_strided_slice %44 {offsets = [0, 56], sizes = [8, 8], strides = [1, 1]} : vector<8x96xf32> to vector<8x8xf32>
    %132 = arith.truncf %131 : vector<8x8xf32> to vector<8x8xbf16>
    %133 = vector.extract_strided_slice %44 {offsets = [0, 88], sizes = [8, 8], strides = [1, 1]} : vector<8x96xf32> to vector<8x8xf32>
    %134 = arith.truncf %133 : vector<8x8xf32> to vector<8x8xbf16>
    %135 = tpu.transpose %132, [1, 0] : vector<8x8xbf16> -> vector<8x8xbf16>
    %cst_49 = arith.constant dense<0.000000e+00> : vector<8x8xf32>
    %136 = tpu.matmul %130, %135, %cst_49 {dimension_numbers = #tpu.dot_dimension_numbers<[1], [0], [0], [1], [0, 0, 1, 1], [], []>} : vector<8x8xbf16>, vector<8x8xbf16>, vector<8x8xf32> -> vector<8x8xf32>
    %cst_50 = arith.constant 0.353553385 : f32
    %137 = vector.broadcast %cst_50 : f32 to vector<8x8xf32>
    %138 = arith.mulf %136, %137 : vector<8x8xf32>
    %cst_51 = arith.constant 0.000000e+00 : f32
    %139 = vector.broadcast %cst_51 : f32 to vector<1x8xf32>
    %140 = arith.cmpf oeq, %5, %139 : vector<1x8xf32>
    %cst_52 = arith.constant -1.000000e+09 : f32
    %141 = vector.shape_cast %140 : vector<1x8xi1> to vector<1x8xi1>
    %142 = vector.broadcast %141 : vector<1x8xi1> to vector<8x8xi1>
    %143 = vector.broadcast %cst_52 : f32 to vector<8x8xf32>
    %144 = arith.select %142, %143, %138 : vector<8x8xi1>, vector<8x8xf32>
    %cst_53 = arith.constant dense<0xFF800000> : vector<8xf32>
    %145 = vector.multi_reduction <maximumf>, %144, %cst_53 [1] : vector<8x8xf32> to vector<8xf32>
    %146 = vector.shape_cast %145 : vector<8xf32> to vector<8x1xf32>
    %147 = vector.broadcast %146 : vector<8x1xf32> to vector<8x8xf32>
    %148 = arith.subf %144, %147 : vector<8x8xf32>
    %149 = math.exp %148 : vector<8x8xf32>
    %cst_54 = arith.constant dense<0.000000e+00> : vector<8xf32>
    %150 = vector.multi_reduction <add>, %149, %cst_54 [1] : vector<8x8xf32> to vector<8xf32>
    %151 = vector.shape_cast %150 : vector<8xf32> to vector<8x1xf32>
    %152 = tpu.reciprocal %151 {approx = true} : vector<8x1xf32> -> vector<8x1xf32>
    %153 = vector.broadcast %152 : vector<8x1xf32> to vector<8x8xf32>
    %154 = arith.mulf %149, %153 : vector<8x8xf32>
    %155 = arith.truncf %154 : vector<8x8xf32> to vector<8x8xbf16>
    %cst_55 = arith.constant dense<0.000000e+00> : vector<8x8xf32>
    %156 = tpu.matmul %155, %134, %cst_55 {dimension_numbers = #tpu.dot_dimension_numbers<[1], [0], [0], [1], [0, 0, 1, 1], [], []>} : vector<8x8xbf16>, vector<8x8xbf16>, vector<8x8xf32> -> vector<8x8xf32>
    %157 = tpu.concatenate %72, %100, %128, %156 in 1 : vector<8x8xf32>, vector<8x8xf32>, vector<8x8xf32>, vector<8x8xf32> -> vector<8x32xf32>
    %158 = arith.truncf %157 : vector<8x32xf32> to vector<8x32xbf16>
    %cst_56 = arith.constant dense<0.000000e+00> : vector<8x32xf32>
    %159 = tpu.matmul %158, %38, %cst_56 {dimension_numbers = #tpu.dot_dimension_numbers<[1], [0], [0], [1], [0, 0, 1, 1], [], []>} : vector<8x32xbf16>, vector<32x32xbf16>, vector<8x32xf32> -> vector<8x32xf32>
    %160 = vector.broadcast %40 : vector<1x32xf32> to vector<8x32xf32>
    %161 = arith.addf %159, %160 : vector<8x32xf32>
    %162 = arith.addf %3, %161 : vector<8x32xf32>
    %163 = vector.extract_strided_slice %7 {offsets = [1, 0], sizes = [1, 32], strides = [1, 1]} : vector<2x32xf32> to vector<1x32xf32>
    %164 = vector.extract_strided_slice %9 {offsets = [1, 0], sizes = [1, 32], strides = [1, 1]} : vector<2x32xf32> to vector<1x32xf32>
    %cst_57 = arith.constant dense<0.000000e+00> : vector<8xf32>
    %165 = vector.multi_reduction <add>, %162, %cst_57 [1] : vector<8x32xf32> to vector<8xf32>
    %166 = vector.shape_cast %165 : vector<8xf32> to vector<8x1xf32>
    %cst_58 = arith.constant 3.200000e+01 : f32
    %167 = vector.broadcast %cst_58 : f32 to vector<8x1xf32>
    %168 = arith.divf %166, %167 : vector<8x1xf32>
    %169 = vector.broadcast %168 : vector<8x1xf32> to vector<8x32xf32>
    %170 = arith.subf %162, %169 : vector<8x32xf32>
    %171 = arith.mulf %170, %170 : vector<8x32xf32>
    %cst_59 = arith.constant dense<0.000000e+00> : vector<8xf32>
    %172 = vector.multi_reduction <add>, %171, %cst_59 [1] : vector<8x32xf32> to vector<8xf32>
    %173 = vector.shape_cast %172 : vector<8xf32> to vector<8x1xf32>
    %cst_60 = arith.constant 0.0322580636 : f32
    %174 = vector.broadcast %cst_60 : f32 to vector<8x1xf32>
    %175 = arith.mulf %173, %174 : vector<8x1xf32>
    %176 = math.sqrt %175 : vector<8x1xf32>
    %177 = vector.broadcast %163 : vector<1x32xf32> to vector<8x32xf32>
    %178 = arith.mulf %177, %170 : vector<8x32xf32>
    %cst_61 = arith.constant 9.99999997E-7 : f32
    %179 = vector.broadcast %cst_61 : f32 to vector<8x1xf32>
    %180 = arith.addf %176, %179 : vector<8x1xf32>
    %181 = tpu.reciprocal %180 {approx = true} : vector<8x1xf32> -> vector<8x1xf32>
    %182 = vector.broadcast %181 : vector<8x1xf32> to vector<8x32xf32>
    %183 = arith.mulf %178, %182 : vector<8x32xf32>
    %184 = vector.broadcast %164 : vector<1x32xf32> to vector<8x32xf32>
    %185 = arith.addf %183, %184 : vector<8x32xf32>
    %186 = arith.truncf %185 : vector<8x32xf32> to vector<8x32xbf16>
    %c0_62 = arith.constant 0 : index
    %c0_63 = arith.constant 0 : index
    %c0_64 = arith.constant 0 : index
    %187 = vector.load %arg10[%c0_62, %c0_63, %c0_64] : memref<1x32x64xbf16, #tpu.memory_space<vmem>>, vector<1x32x64xbf16>
    %188 = vector.shape_cast %187 : vector<1x32x64xbf16> to vector<32x64xbf16>
    %cst_65 = arith.constant dense<0.000000e+00> : vector<8x64xf32>
    %189 = tpu.matmul %186, %188, %cst_65 {dimension_numbers = #tpu.dot_dimension_numbers<[1], [0], [0], [1], [0, 0, 1, 1], [], []>} : vector<8x32xbf16>, vector<32x64xbf16>, vector<8x64xf32> -> vector<8x64xf32>
    %c0_66 = arith.constant 0 : index
    %c0_67 = arith.constant 0 : index
    %c0_68 = arith.constant 0 : index
    %190 = vector.load %arg11[%c0_66, %c0_67, %c0_68] : memref<1x1x64xf32, #tpu.memory_space<vmem>>, vector<1x1x64xf32>
    %191 = vector.shape_cast %190 : vector<1x1x64xf32> to vector<1x64xf32>
    %192 = vector.broadcast %191 : vector<1x64xf32> to vector<8x64xf32>
    %193 = arith.addf %189, %192 : vector<8x64xf32>
    %cst_69 = arith.constant 0.000000e+00 : f32
    %194 = vector.broadcast %cst_69 : f32 to vector<8x64xf32>
    %195 = arith.maximumf %193, %194 : vector<8x64xf32>
    %196 = arith.truncf %195 : vector<8x64xf32> to vector<8x64xbf16>
    %c0_70 = arith.constant 0 : index
    %c0_71 = arith.constant 0 : index
    %c0_72 = arith.constant 0 : index
    %197 = vector.load %arg12[%c0_70, %c0_71, %c0_72] : memref<1x64x32xbf16, #tpu.memory_space<vmem>>, vector<1x64x32xbf16>
    %198 = vector.shape_cast %197 : vector<1x64x32xbf16> to vector<64x32xbf16>
    %cst_73 = arith.constant dense<0.000000e+00> : vector<8x32xf32>
    %199 = tpu.matmul %196, %198, %cst_73 {dimension_numbers = #tpu.dot_dimension_numbers<[1], [0], [0], [1], [0, 0, 1, 1], [], []>} : vector<8x64xbf16>, vector<64x32xbf16>, vector<8x32xf32> -> vector<8x32xf32>
    %200 = arith.addf %162, %199 : vector<8x32xf32>
    %c0_74 = arith.constant 0 : index
    %c0_75 = arith.constant 0 : index
    %c0_76 = arith.constant 0 : index
    %201 = vector.load %arg13[%c0_74, %c0_75, %c0_76] : memref<1x1x32xf32, #tpu.memory_space<vmem>>, vector<1x1x32xf32>
    %202 = vector.shape_cast %201 : vector<1x1x32xf32> to vector<1x32xf32>
    %203 = vector.broadcast %202 : vector<1x32xf32> to vector<8x32xf32>
    %204 = arith.addf %200, %203 : vector<8x32xf32>
    %c0_77 = arith.constant 0 : index
    %c0_78 = arith.constant 0 : index
    %205 = vector.load %arg17[%c0_77, %c0_78] : memref<8x32xf32, #tpu.memory_space<vmem>>, vector<8x32xf32>
    tpu.vector_store %arg17[%c0_77, %c0_78], %204 {strides = array<i32>} : memref<8x32xf32, #tpu.memory_space<vmem>>, vector<8x32xf32>,
    %c1_i32 = arith.constant 1 : i32
    %206 = arith.cmpi eq, %arg1, %c1_i32 : i32
    %207 = arith.extui %206 : i1 to i32
    %c0_i32_79 = arith.constant 0 : i32
    %208 = arith.cmpi ne, %207, %c0_i32_79 : i32
    scf.if %208 {
      %c0_80 = arith.constant 0 : index
      %c0_81 = arith.constant 0 : index
      %209 = vector.load %arg14[%c0_80, %c0_81] : memref<1x32xf32, #tpu.memory_space<vmem>>, vector<1x32xf32>
      %c0_82 = arith.constant 0 : index
      %c0_83 = arith.constant 0 : index
      %210 = vector.load %arg15[%c0_82, %c0_83] : memref<1x32xf32, #tpu.memory_space<vmem>>, vector<1x32xf32>
      %cst_84 = arith.constant dense<0.000000e+00> : vector<8xf32>
      %211 = vector.multi_reduction <add>, %204, %cst_84 [1] : vector<8x32xf32> to vector<8xf32>
      %212 = vector.shape_cast %211 : vector<8xf32> to vector<8x1xf32>
      %cst_85 = arith.constant 3.200000e+01 : f32
      %213 = vector.broadcast %cst_85 : f32 to vector<8x1xf32>
      %214 = arith.divf %212, %213 : vector<8x1xf32>
      %215 = vector.broadcast %214 : vector<8x1xf32> to vector<8x32xf32>
      %216 = arith.subf %204, %215 : vector<8x32xf32>
      %217 = arith.mulf %216, %216 : vector<8x32xf32>
      %cst_86 = arith.constant dense<0.000000e+00> : vector<8xf32>
      %218 = vector.multi_reduction <add>, %217, %cst_86 [1] : vector<8x32xf32> to vector<8xf32>
      %219 = vector.shape_cast %218 : vector<8xf32> to vector<8x1xf32>
      %cst_87 = arith.constant 0.0322580636 : f32
      %220 = vector.broadcast %cst_87 : f32 to vector<8x1xf32>
      %221 = arith.mulf %219, %220 : vector<8x1xf32>
      %222 = math.sqrt %221 : vector<8x1xf32>
      %223 = vector.broadcast %209 : vector<1x32xf32> to vector<8x32xf32>
      %224 = arith.mulf %223, %216 : vector<8x32xf32>
      %cst_88 = arith.constant 9.99999997E-7 : f32
      %225 = vector.broadcast %cst_88 : f32 to vector<8x1xf32>
      %226 = arith.addf %222, %225 : vector<8x1xf32>
      %227 = tpu.reciprocal %226 {approx = true} : vector<8x1xf32> -> vector<8x1xf32>
      %228 = vector.broadcast %227 : vector<8x1xf32> to vector<8x32xf32>
      %229 = arith.mulf %224, %228 : vector<8x32xf32>
      %230 = vector.broadcast %210 : vector<1x32xf32> to vector<8x32xf32>
      %231 = arith.addf %229, %230 : vector<8x32xf32>
      %c0_89 = arith.constant 0 : index
      %c0_90 = arith.constant 0 : index
      %c0_91 = arith.constant 0 : index
      %232 = vector.load %arg16[%c0_89, %c0_90, %c0_91] : memref<1x8x32xf32, #tpu.memory_space<vmem>>, vector<1x8x32xf32>
      %233 = vector.shape_cast %232 : vector<1x8x32xf32> to vector<8x32xf32>
      %234 = vector.shape_cast %231 : vector<8x32xf32> to vector<1x8x32xf32>
      tpu.vector_store %arg16[%c0_89, %c0_90, %c0_91], %234 {strides = array<i32>} : memref<1x8x32xf32, #tpu.memory_space<vmem>>, vector<1x8x32xf32>,
    } else {
    }
    return
  }
  func.func @transform_0(%arg0: i32, %arg1: i32) -> (i32, i32, i32) {
    %c0_i32 = arith.constant 0 : i32
    %c0_i32_0 = arith.constant 0 : i32
    %c0_i32_1 = arith.constant 0 : i32
    return %arg0, %c0_i32, %c0_i32_0 : i32, i32, i32
  }
  func.func @transform_1(%arg0: i32, %arg1: i32) -> (i32, i32, i32) {
    %c0_i32 = arith.constant 0 : i32
    %c0_i32_0 = arith.constant 0 : i32
    %c0_i32_1 = arith.constant 0 : i32
    return %arg0, %c0_i32, %c0_i32_0 : i32, i32, i32
  }
  func.func @transform_2(%arg0: i32, %arg1: i32) -> (i32, i32, i32) {
    %c0_i32 = arith.constant 0 : i32
    %c0_i32_0 = arith.constant 0 : i32
    %c0_i32_1 = arith.constant 0 : i32
    return %arg1, %c0_i32, %c0_i32_0 : i32, i32, i32
  }
  func.func @transform_3(%arg0: i32, %arg1: i32) -> (i32, i32, i32) {
    %c0_i32 = arith.constant 0 : i32
    %c0_i32_0 = arith.constant 0 : i32
    %c0_i32_1 = arith.constant 0 : i32
    return %arg1, %c0_i32, %c0_i32_0 : i32, i32, i32
  }
  func.func @transform_4(%arg0: i32, %arg1: i32) -> (i32, i32, i32) {
    %c0_i32 = arith.constant 0 : i32
    %c0_i32_0 = arith.constant 0 : i32
    %c0_i32_1 = arith.constant 0 : i32
    return %arg1, %c0_i32, %c0_i32_0 : i32, i32, i32
  }
  func.func @transform_5(%arg0: i32, %arg1: i32) -> (i32, i32, i32) {
    %c0_i32 = arith.constant 0 : i32
    %c0_i32_0 = arith.constant 0 : i32
    %c0_i32_1 = arith.constant 0 : i32
    return %arg1, %c0_i32, %c0_i32_0 : i32, i32, i32
  }
  func.func @transform_6(%arg0: i32, %arg1: i32) -> (i32, i32, i32) {
    %c0_i32 = arith.constant 0 : i32
    %c0_i32_0 = arith.constant 0 : i32
    %c0_i32_1 = arith.constant 0 : i32
    return %arg1, %c0_i32, %c0_i32_0 : i32, i32, i32
  }
  func.func @transform_7(%arg0: i32, %arg1: i32) -> (i32, i32, i32) {
    %c0_i32 = arith.constant 0 : i32
    %c0_i32_0 = arith.constant 0 : i32
    %c0_i32_1 = arith.constant 0 : i32
    return %arg1, %c0_i32, %c0_i32_0 : i32, i32, i32
  }
  func.func @transform_8(%arg0: i32, %arg1: i32) -> (i32, i32, i32) {
    %c0_i32 = arith.constant 0 : i32
    %c0_i32_0 = arith.constant 0 : i32
    %c0_i32_1 = arith.constant 0 : i32
    return %arg1, %c0_i32, %c0_i32_0 : i32, i32, i32
  }
  func.func @transform_9(%arg0: i32, %arg1: i32) -> (i32, i32, i32) {
    %c0_i32 = arith.constant 0 : i32
    %c0_i32_0 = arith.constant 0 : i32
    %c0_i32_1 = arith.constant 0 : i32
    return %arg1, %c0_i32, %c0_i32_0 : i32, i32, i32
  }
  func.func @transform_10(%arg0: i32, %arg1: i32) -> (i32, i32, i32) {
    %c0_i32 = arith.constant 0 : i32
    %c0_i32_0 = arith.constant 0 : i32
    %c0_i32_1 = arith.constant 0 : i32
    return %arg1, %c0_i32, %c0_i32_0 : i32, i32, i32
  }
  func.func @transform_11(%arg0: i32, %arg1: i32) -> (i32, i32, i32) {
    %c0_i32 = arith.constant 0 : i32
    %c0_i32_0 = arith.constant 0 : i32
    %c0_i32_1 = arith.constant 0 : i32
    return %arg1, %c0_i32, %c0_i32_0 : i32, i32, i32
  }
  func.func @transform_12(%arg0: i32, %arg1: i32) -> (i32, i32) {
    %c0_i32 = arith.constant 0 : i32
    %c0_i32_0 = arith.constant 0 : i32
    %c0_i32_1 = arith.constant 0 : i32
    return %c0_i32, %c0_i32_0 : i32, i32
  }
  func.func @transform_13(%arg0: i32, %arg1: i32) -> (i32, i32) {
    %c0_i32 = arith.constant 0 : i32
    %c0_i32_0 = arith.constant 0 : i32
    %c0_i32_1 = arith.constant 0 : i32
    return %c0_i32, %c0_i32_0 : i32, i32
  }
  func.func @transform_14(%arg0: i32, %arg1: i32) -> (i32, i32, i32) {
    %c0_i32 = arith.constant 0 : i32
    %c0_i32_0 = arith.constant 0 : i32
    %c0_i32_1 = arith.constant 0 : i32
    return %arg0, %c0_i32, %c0_i32_0 : i32, i32, i32
  }
}

</mosaic_0001>

<llo_original>
// kernel: tpu_custom_call.1
$region0: #{tpu_custom_call.1}
  #allocation0 [shape = 'u32[]', space=smem, size = 0x4, offset = 0x4, fixed_abs, tag = 'smem constant byte address 0x4 - core index']
  #allocation1 [shape = 'u32[144,128]{1,0:T(1,128)}', space=vmem, size = 0x12000, scoped, tag = 'internal scratch']
  #allocation2 [shape = 'f32[8,32]{1,0:T(8,128)}', space=vmem, size = 0x1000, scoped, tag = 'scratch operand']
  %s0 = inlined_call_operand.hbm [shape: f32[2,8,32], index: 0, kind: input, shape index: {}]
  %s1 = inlined_call_operand.hbm [shape: f32[2,1,8], index: 1, kind: input, shape index: {}]
  %s2 = inlined_call_operand.vmem [shape: f32[2,2,32], index: 2, kind: input, shape index: {}]
  %s3 = inlined_call_operand.hbm [shape: f32[2,2,32], index: 3, kind: input, shape index: {}]
  %s4 = inlined_call_operand.vmem [shape: bf16[2,32,96], index: 4, kind: input, shape index: {}]
  %s5 = inlined_call_operand.hbm [shape: f32[2,1,96], index: 5, kind: input, shape index: {}]
  %s6 = inlined_call_operand.vmem [shape: bf16[2,32,32], index: 6, kind: input, shape index: {}]
  %s7 = inlined_call_operand.hbm [shape: f32[2,1,32], index: 7, kind: input, shape index: {}]
  %s8 = inlined_call_operand.vmem [shape: bf16[2,32,64], index: 8, kind: input, shape index: {}]
  %s9 = inlined_call_operand.hbm [shape: f32[2,1,64], index: 9, kind: input, shape index: {}]
  %s10 = inlined_call_operand.vmem [shape: bf16[2,64,32], index: 10, kind: input, shape index: {}]
  %s11 = inlined_call_operand.vmem [shape: f32[2,1,32], index: 11, kind: input, shape index: {}]
  %s12 = inlined_call_operand.vmem [shape: f32[1,32], index: 12, kind: input, shape index: {}]
  %s13 = inlined_call_operand.vmem [shape: f32[1,32], index: 13, kind: input, shape index: {}]
  %s14 = inlined_call_operand.hbm [shape: f32[2,8,32], index: 14, kind: output, shape index: {}]
  %s15 = sld [smem:[#allocation0]]
  $region121: #{tpu_custom_call.1} parent=0
    _
  %s17 = ssub.s32 1, %s15
  %s18 = scalar_select 0, %s17, %s15
  $region1: #{tpu_custom_call.1} parent=0
    #allocation3 [shape = 'u8[8192]{0}', space=vmem, size = 0x2000, scoped, tag = 'input window, operand 0']
    #allocation4 [shape = 's32[2]{0}', space=sflag, size = 0x8, scoped, tag = 'scoped memory for tpu_custom_call.1']
    #allocation5 [shape = 's32[2]{0}', space=sflag, size = 0x8, scoped, tag = 'scoped memory for tpu_custom_call.1']
    #allocation6 [shape = 'u8[1024]{0}', space=vmem, size = 0x400, scoped, tag = 'input window, operand 1']
    #allocation7 [shape = 's32[2]{0}', space=sflag, size = 0x8, scoped, tag = 'scoped memory for tpu_custom_call.1']
    #allocation8 [shape = 'u8[2048]{0}', space=vmem, size = 0x800, scoped, tag = 'input window, operand 3']
    #allocation9 [shape = 'u8[1024]{0}', space=vmem, size = 0x400, scoped, tag = 'input window, operand 5']
    #allocation10 [shape = 's32[2]{0}', space=sflag, size = 0x8, scoped, tag = 'scoped memory for tpu_custom_call.1']
    #allocation11 [shape = 'u8[1024]{0}', space=vmem, size = 0x400, scoped, tag = 'input window, operand 7']
    #allocation12 [shape = 'u8[1024]{0}', space=vmem, size = 0x400, scoped, tag = 'input window, operand 9']
    #allocation13 [shape = 's32[2]{0}', space=sflag, size = 0x8, scoped, tag = 'scoped memory for tpu_custom_call.1']
    #allocation14 [shape = 'u8[8192]{0}', space=vmem, size = 0x2000, scoped, tag = 'output window, operand 0']
    %19 = vsyncpa [#allocation4], 0
    %s20 = scalar_lea.sflag [#allocation4], 1
    %21 = vsyncpa %s20, 0
    %22 = vsyncpa [#allocation7], 0
    %s23 = scalar_lea.sflag [#allocation7], 1
    %24 = vsyncpa %s23, 0
    %25 = vsyncpa [#allocation10], 0
    %s26 = scalar_lea.sflag [#allocation10], 1
    %27 = vsyncpa %s26, 0
    %28 = vsyncpa [#allocation13], 0
    %s29 = scalar_lea.sflag [#allocation13], 1
    %30 = vsyncpa %s29, 0
    %31 = vsyncpa [#allocation5], 0
    %s32 = scalar_lea.sflag [#allocation5], 1
    %33 = vsyncpa %s32, 0
    loop: start=0, step=1, limit=6
    $region2: #{tpu_custom_call.1} parent=1 // loop_pre_header
      _
    $region3: #{tpu_custom_call.1} parent=1 // loop_header
      %s35 = sphi 0, %s39
      %p36 = scmp.ge.s32.totalorder %s35, 6
      %s42 = sphi 0, %s54
      %s43 = sphi 0, %s50
      %s44 = sphi 0, %s42
      %s45 = sphi 0, %s43
      %s46 = sphi 0, %s44
      %s47 = sphi 0, %s45
      %s57 = sphi 0, %s59
      %s60 = sphi 0, %s57
      %s61 = sphi 0, %s60
      %s77 = sphi 0, %s61
      %s83 = sphi 0, %s85
      %s86 = sphi 0, %s83
      %s87 = sphi 0, %s86
      %s103 = sphi 0, %s87
      %s109 = sphi 0, %s111
      %s112 = sphi 0, %s109
      %s113 = sphi 0, %s112
      %s129 = sphi 0, %s113
      %s135 = sphi 0, %s137
      %s138 = sphi 0, %s135
      %s139 = sphi 0, %s138
      %s155 = sphi 0, %s139
      %s161 = sphi 0, %s163
      %s164 = sphi 0, %s161
      %s165 = sphi 0, %s164
      %s181 = sphi 0, %s165
      %s187 = sphi 0, %s189
      %s190 = sphi 0, %s187
      %s191 = sphi 0, %s190
      %s207 = sphi 0, %s191
      %s213 = sphi 0, %s215
      %s216 = sphi 0, %s213
      %s217 = sphi 0, %s216
      %s233 = sphi 0, %s217
      %s239 = sphi 0, %s241
      %s242 = sphi 0, %s239
      %s243 = sphi 0, %s242
      %s259 = sphi 0, %s243
      %s265 = sphi 0, %s267
      %s268 = sphi 0, %s265
      %s269 = sphi 0, %s268
      %s285 = sphi 0, %s269
      %s291 = sphi 0, %s293
      %s294 = sphi 0, %s291
      %s295 = sphi 0, %s294
      %s311 = sphi 0, %s295
      %s317 = sphi 0, %s319
      %s320 = sphi 0, %s317
      %s321 = sphi 0, %s320
      %s337 = sphi 0, %s321
      %s343 = sphi 0, %s345
      %s346 = sphi 0, %s343
      %s347 = sphi 0, %s346
      %s363 = sphi 0, %s347
      %s367 = sphi 0, %s367
      %s369 = sphi 0, %s367
      %s370 = sphi 0, %s369
      %s384 = sphi 0, %s370
      %s388 = sphi 0, %s388
      %s390 = sphi 0, %s388
      %s391 = sphi 0, %s390
      %s405 = sphi 0, %s391
      %s411 = sphi 0, %s413
      %s414 = sphi 0, %s411
      %s415 = sphi 0, %s414
      %s431 = sphi 0, %s415
    $region4: #{tpu_custom_call.1} parent=1 // loop_header_branch
      %38 = sbr.rel (%p36) target = $region8
    $region5: #{tpu_custom_call.1} parent=1 // loop_body
      %s40 = ssub.s32 %s35, 1
      %s41 = ssub.s32 %s35, 2
      %s48 = sadd.s32 1, %s43
      %p49 = scmp.ge.s32.totalorder %s48, 2
      %s50 = scalar_select %p49, 0, %s48
      %s51 = sadd.s32 1, %s42
      %s52 = scalar_select %p49, %s51, %s42
      %p53 = scmp.ge.s32.totalorder %s52, 2
      %s54 = scalar_select %p53, 0, %s52
      %s55 = ssub.s32 %s42, %s54
      %p56 = scmp.eq.s32.totalorder %s55, 0
      %s58 = sadd.s32 %s57, 1
      %s59 = scalar_select %p56, %s57, %s58
      %p62 = pneg %p56
      %p63 = scmp.eq.s32.totalorder %s35, 3
      %p64 = por %p62, %p63
      %p65 = scmp.ne.s32.totalorder %s57, %s60
      %p66 = scmp.eq.s32.totalorder %s35, 0
      %p67 = por %p65, %p66
      %p68 = scmp.ne.s32.totalorder %s57, %s60
      %p69 = scmp.eq.s32.totalorder %s40, 3
      %p70 = por %p68, %p69
      %p71 = scmp.ne.s32.totalorder %s60, %s61
      %p72 = scmp.eq.s32.totalorder %s40, 0
      %p73 = por %p71, %p72
      %p74 = scmp.ne.s32.totalorder %s60, %s61
      %p75 = scmp.eq.s32.totalorder %s41, 3
      %p76 = por %p74, %p75
      %p78 = scmp.ne.s32.totalorder %s61, %s77
      %p79 = scmp.eq.s32.totalorder %s41, 0
      %p80 = por %p78, %p79
      %s81 = ssub.s32 %s42, %s54
      %p82 = scmp.eq.s32.totalorder %s81, 0
      %s84 = sadd.s32 %s83, 1
      %s85 = scalar_select %p82, %s83, %s84
      %p88 = pneg %p82
      %p89 = scmp.eq.s32.totalorder %s35, 3
      %p90 = por %p88, %p89
      %p91 = scmp.ne.s32.totalorder %s83, %s86
      %p92 = scmp.eq.s32.totalorder %s35, 0
      %p93 = por %p91, %p92
      %p94 = scmp.ne.s32.totalorder %s83, %s86
      %p95 = scmp.eq.s32.totalorder %s40, 3
      %p96 = por %p94, %p95
      %p97 = scmp.ne.s32.totalorder %s86, %s87
      %p98 = scmp.eq.s32.totalorder %s40, 0
      %p99 = por %p97, %p98
      %p100 = scmp.ne.s32.totalorder %s86, %s87
      %p101 = scmp.eq.s32.totalorder %s41, 3
      %p102 = por %p100, %p101
      %p104 = scmp.ne.s32.totalorder %s87, %s103
      %p105 = scmp.eq.s32.totalorder %s41, 0
      %p106 = por %p104, %p105
      %s107 = ssub.s32 %s43, %s50
      %p108 = scmp.eq.s32.totalorder %s107, 0
      %s110 = sadd.s32 %s109, 1
      %s111 = scalar_select %p108, %s109, %s110
      %p114 = pneg %p108
      %p115 = scmp.eq.s32.totalorder %s35, 3
      %p116 = por %p114, %p115
      %p117 = scmp.ne.s32.totalorder %s109, %s112
      %p118 = scmp.eq.s32.totalorder %s35, 0
      %p119 = por %p117, %p118
      %p120 = scmp.ne.s32.totalorder %s109, %s112
      %p121 = scmp.eq.s32.totalorder %s40, 3
      %p122 = por %p120, %p121
      %p123 = scmp.ne.s32.totalorder %s112, %s113
      %p124 = scmp.eq.s32.totalorder %s40, 0
      %p125 = por %p123, %p124
      %p126 = scmp.ne.s32.totalorder %s112, %s113
      %p127 = scmp.eq.s32.totalorder %s41, 3
      %p128 = por %p126, %p127
      %p130 = scmp.ne.s32.totalorder %s113, %s129
      %p131 = scmp.eq.s32.totalorder %s41, 0
      %p132 = por %p130, %p131
      %s133 = ssub.s32 %s43, %s50
      %p134 = scmp.eq.s32.totalorder %s133, 0
      %s136 = sadd.s32 %s135, 1
      %s137 = scalar_select %p134, %s135, %s136
      %p140 = pneg %p134
      %p141 = scmp.eq.s32.totalorder %s35, 3
      %p142 = por %p140, %p141
      %p143 = scmp.ne.s32.totalorder %s135, %s138
      %p144 = scmp.eq.s32.totalorder %s35, 0
      %p145 = por %p143, %p144
      %p146 = scmp.ne.s32.totalorder %s135, %s138
      %p147 = scmp.eq.s32.totalorder %s40, 3
      %p148 = por %p146, %p147
      %p149 = scmp.ne.s32.totalorder %s138, %s139
      %p150 = scmp.eq.s32.totalorder %s40, 0
      %p151 = por %p149, %p150
      %p152 = scmp.ne.s32.totalorder %s138, %s139
      %p153 = scmp.eq.s32.totalorder %s41, 3
      %p154 = por %p152, %p153
      %p156 = scmp.ne.s32.totalorder %s139, %s155
      %p157 = scmp.eq.s32.totalorder %s41, 0
      %p158 = por %p156, %p157
      %s159 = ssub.s32 %s43, %s50
      %p160 = scmp.eq.s32.totalorder %s159, 0
      %s162 = sadd.s32 %s161, 1
      %s163 = scalar_select %p160, %s161, %s162
      %p166 = pneg %p160
      %p167 = scmp.eq.s32.totalorder %s35, 3
      %p168 = por %p166, %p167
      %p169 = scmp.ne.s32.totalorder %s161, %s164
      %p170 = scmp.eq.s32.totalorder %s35, 0
      %p171 = por %p169, %p170
      %p172 = scmp.ne.s32.totalorder %s161, %s164
      %p173 = scmp.eq.s32.totalorder %s40, 3
      %p174 = por %p172, %p173
      %p175 = scmp.ne.s32.totalorder %s164, %s165
      %p176 = scmp.eq.s32.totalorder %s40, 0
      %p177 = por %p175, %p176
      %p178 = scmp.ne.s32.totalorder %s164, %s165
      %p179 = scmp.eq.s32.totalorder %s41, 3
      %p180 = por %p178, %p179
      %p182 = scmp.ne.s32.totalorder %s165, %s181
      %p183 = scmp.eq.s32.totalorder %s41, 0
      %p184 = por %p182, %p183
      %s185 = ssub.s32 %s43, %s50
      %p186 = scmp.eq.s32.totalorder %s185, 0
      %s188 = sadd.s32 %s187, 1
      %s189 = scalar_select %p186, %s187, %s188
      %p192 = pneg %p186
      %p193 = scmp.eq.s32.totalorder %s35, 3
      %p194 = por %p192, %p193
      %p195 = scmp.ne.s32.totalorder %s187, %s190
      %p196 = scmp.eq.s32.totalorder %s35, 0
      %p197 = por %p195, %p196
      %p198 = scmp.ne.s32.totalorder %s187, %s190
      %p199 = scmp.eq.s32.totalorder %s40, 3
      %p200 = por %p198, %p199
      %p201 = scmp.ne.s32.totalorder %s190, %s191
      %p202 = scmp.eq.s32.totalorder %s40, 0
      %p203 = por %p201, %p202
      %p204 = scmp.ne.s32.totalorder %s190, %s191
      %p205 = scmp.eq.s32.totalorder %s41, 3
      %p206 = por %p204, %p205
      %p208 = scmp.ne.s32.totalorder %s191, %s207
      %p209 = scmp.eq.s32.totalorder %s41, 0
      %p210 = por %p208, %p209
      %s211 = ssub.s32 %s43, %s50
      %p212 = scmp.eq.s32.totalorder %s211, 0
      %s214 = sadd.s32 %s213, 1
      %s215 = scalar_select %p212, %s213, %s214
      %p218 = pneg %p212
      %p219 = scmp.eq.s32.totalorder %s35, 3
      %p220 = por %p218, %p219
      %p221 = scmp.ne.s32.totalorder %s213, %s216
      %p222 = scmp.eq.s32.totalorder %s35, 0
      %p223 = por %p221, %p222
      %p224 = scmp.ne.s32.totalorder %s213, %s216
      %p225 = scmp.eq.s32.totalorder %s40, 3
      %p226 = por %p224, %p225
      %p227 = scmp.ne.s32.totalorder %s216, %s217
      %p228 = scmp.eq.s32.totalorder %s40, 0
      %p229 = por %p227, %p228
      %p230 = scmp.ne.s32.totalorder %s216, %s217
      %p231 = scmp.eq.s32.totalorder %s41, 3
      %p232 = por %p230, %p231
      %p234 = scmp.ne.s32.totalorder %s217, %s233
      %p235 = scmp.eq.s32.totalorder %s41, 0
      %p236 = por %p234, %p235
      %s237 = ssub.s32 %s43, %s50
      %p238 = scmp.eq.s32.totalorder %s237, 0
      %s240 = sadd.s32 %s239, 1
      %s241 = scalar_select %p238, %s239, %s240
      %p244 = pneg %p238
      %p245 = scmp.eq.s32.totalorder %s35, 3
      %p246 = por %p244, %p245
      %p247 = scmp.ne.s32.totalorder %s239, %s242
      %p248 = scmp.eq.s32.totalorder %s35, 0
      %p249 = por %p247, %p248
      %p250 = scmp.ne.s32.totalorder %s239, %s242
      %p251 = scmp.eq.s32.totalorder %s40, 3
      %p252 = por %p250, %p251
      %p253 = scmp.ne.s32.totalorder %s242, %s243
      %p254 = scmp.eq.s32.totalorder %s40, 0
      %p255 = por %p253, %p254
      %p256 = scmp.ne.s32.totalorder %s242, %s243
      %p257 = scmp.eq.s32.totalorder %s41, 3
      %p258 = por %p256, %p257
      %p260 = scmp.ne.s32.totalorder %s243, %s259
      %p261 = scmp.eq.s32.totalorder %s41, 0
      %p262 = por %p260, %p261
      %s263 = ssub.s32 %s43, %s50
      %p264 = scmp.eq.s32.totalorder %s263, 0
      %s266 = sadd.s32 %s265, 1
      %s267 = scalar_select %p264, %s265, %s266
      %p270 = pneg %p264
      %p271 = scmp.eq.s32.totalorder %s35, 3
      %p272 = por %p270, %p271
      %p273 = scmp.ne.s32.totalorder %s265, %s268
      %p274 = scmp.eq.s32.totalorder %s35, 0
      %p275 = por %p273, %p274
      %p276 = scmp.ne.s32.totalorder %s265, %s268
      %p277 = scmp.eq.s32.totalorder %s40, 3
      %p278 = por %p276, %p277
      %p279 = scmp.ne.s32.totalorder %s268, %s269
      %p280 = scmp.eq.s32.totalorder %s40, 0
      %p281 = por %p279, %p280
      %p282 = scmp.ne.s32.totalorder %s268, %s269
      %p283 = scmp.eq.s32.totalorder %s41, 3
      %p284 = por %p282, %p283
      %p286 = scmp.ne.s32.totalorder %s269, %s285
      %p287 = scmp.eq.s32.totalorder %s41, 0
      %p288 = por %p286, %p287
      %s289 = ssub.s32 %s43, %s50
      %p290 = scmp.eq.s32.totalorder %s289, 0
      %s292 = sadd.s32 %s291, 1
      %s293 = scalar_select %p290, %s291, %s292
      %p296 = pneg %p290
      %p297 = scmp.eq.s32.totalorder %s35, 3
      %p298 = por %p296, %p297
      %p299 = scmp.ne.s32.totalorder %s291, %s294
      %p300 = scmp.eq.s32.totalorder %s35, 0
      %p301 = por %p299, %p300
      %p302 = scmp.ne.s32.totalorder %s291, %s294
      %p303 = scmp.eq.s32.totalorder %s40, 3
      %p304 = por %p302, %p303
      %p305 = scmp.ne.s32.totalorder %s294, %s295
      %p306 = scmp.eq.s32.totalorder %s40, 0
      %p307 = por %p305, %p306
      %p308 = scmp.ne.s32.totalorder %s294, %s295
      %p309 = scmp.eq.s32.totalorder %s41, 3
      %p310 = por %p308, %p309
      %p312 = scmp.ne.s32.totalorder %s295, %s311
      %p313 = scmp.eq.s32.totalorder %s41, 0
      %p314 = por %p312, %p313
      %s315 = ssub.s32 %s43, %s50
      %p316 = scmp.eq.s32.totalorder %s315, 0
      %s318 = sadd.s32 %s317, 1
      %s319 = scalar_select %p316, %s317, %s318
      %p322 = pneg %p316
      %p323 = scmp.eq.s32.totalorder %s35, 3
      %p324 = por %p322, %p323
      %p325 = scmp.ne.s32.totalorder %s317, %s320
      %p326 = scmp.eq.s32.totalorder %s35, 0
      %p327 = por %p325, %p326
      %p328 = scmp.ne.s32.totalorder %s317, %s320
      %p329 = scmp.eq.s32.totalorder %s40, 3
      %p330 = por %p328, %p329
      %p331 = scmp.ne.s32.totalorder %s320, %s321
      %p332 = scmp.eq.s32.totalorder %s40, 0
      %p333 = por %p331, %p332
      %p334 = scmp.ne.s32.totalorder %s320, %s321
      %p335 = scmp.eq.s32.totalorder %s41, 3
      %p336 = por %p334, %p335
      %p338 = scmp.ne.s32.totalorder %s321, %s337
      %p339 = scmp.eq.s32.totalorder %s41, 0
      %p340 = por %p338, %p339
      %s341 = ssub.s32 %s43, %s50
      %p342 = scmp.eq.s32.totalorder %s341, 0
      %s344 = sadd.s32 %s343, 1
      %s345 = scalar_select %p342, %s343, %s344
      %p348 = pneg %p342
      %p349 = scmp.eq.s32.totalorder %s35, 3
      %p350 = por %p348, %p349
      %p351 = scmp.ne.s32.totalorder %s343, %s346
      %p352 = scmp.eq.s32.totalorder %s35, 0
      %p353 = por %p351, %p352
      %p354 = scmp.ne.s32.totalorder %s343, %s346
      %p355 = scmp.eq.s32.totalorder %s40, 3
      %p356 = por %p354, %p355
      %p357 = scmp.ne.s32.totalorder %s346, %s347
      %p358 = scmp.eq.s32.totalorder %s40, 0
      %p359 = por %p357, %p358
      %p360 = scmp.ne.s32.totalorder %s346, %s347
      %p361 = scmp.eq.s32.totalorder %s41, 3
      %p362 = por %p360, %p361
      %p364 = scmp.ne.s32.totalorder %s347, %s363
      %p365 = scmp.eq.s32.totalorder %s41, 0
      %p366 = por %p364, %p365
      %s368 = sadd.s32 %s367, 1
      %p371 = scmp.eq.s32.totalorder %s35, 3
      %p372 = scmp.ne.s32.totalorder %s367, %s369
      %p373 = scmp.eq.s32.totalorder %s35, 0
      %p374 = por %p372, %p373
      %p375 = scmp.ne.s32.totalorder %s367, %s369
      %p376 = scmp.eq.s32.totalorder %s40, 3
      %p377 = por %p375, %p376
      %p378 = scmp.ne.s32.totalorder %s369, %s370
      %p379 = scmp.eq.s32.totalorder %s40, 0
      %p380 = por %p378, %p379
      %p381 = scmp.ne.s32.totalorder %s369, %s370
      %p382 = scmp.eq.s32.totalorder %s41, 3
      %p383 = por %p381, %p382
      %p385 = scmp.ne.s32.totalorder %s370, %s384
      %p386 = scmp.eq.s32.totalorder %s41, 0
      %p387 = por %p385, %p386
      %s389 = sadd.s32 %s388, 1
      %p392 = scmp.eq.s32.totalorder %s35, 3
      %p393 = scmp.ne.s32.totalorder %s388, %s390
      %p394 = scmp.eq.s32.totalorder %s35, 0
      %p395 = por %p393, %p394
      %p396 = scmp.ne.s32.totalorder %s388, %s390
      %p397 = scmp.eq.s32.totalorder %s40, 3
      %p398 = por %p396, %p397
      %p399 = scmp.ne.s32.totalorder %s390, %s391
      %p400 = scmp.eq.s32.totalorder %s40, 0
      %p401 = por %p399, %p400
      %p402 = scmp.ne.s32.totalorder %s390, %s391
      %p403 = scmp.eq.s32.totalorder %s41, 3
      %p404 = por %p402, %p403
      %p406 = scmp.ne.s32.totalorder %s391, %s405
      %p407 = scmp.eq.s32.totalorder %s41, 0
      %p408 = por %p406, %p407
      %s409 = ssub.s32 %s42, %s54
      %p410 = scmp.eq.s32.totalorder %s409, 0
      %s412 = sadd.s32 %s411, 1
      %s413 = scalar_select %p410, %s411, %s412
      %p416 = pneg %p410
      %p417 = scmp.eq.s32.totalorder %s35, 3
      %p418 = por %p416, %p417
      %p419 = scmp.ne.s32.totalorder %s411, %s414
      %p420 = scmp.eq.s32.totalorder %s35, 0
      %p421 = por %p419, %p420
      %p422 = scmp.ne.s32.totalorder %s411, %s414
      %p423 = scmp.eq.s32.totalorder %s40, 3
      %p424 = por %p422, %p423
      %p425 = scmp.ne.s32.totalorder %s414, %s415
      %p426 = scmp.eq.s32.totalorder %s40, 0
      %p427 = por %p425, %p426
      %p428 = scmp.ne.s32.totalorder %s414, %s415
      %p429 = scmp.eq.s32.totalorder %s41, 3
      %p430 = por %p428, %p429
      %p432 = scmp.ne.s32.totalorder %s415, %s431
      %p433 = scmp.eq.s32.totalorder %s41, 0
      %p434 = por %p432, %p433
      %p435 = scmp.le.s32.totalorder 1, %s35
      %p436 = scmp.lt.s32.totalorder %s35, 5
      %p437 = pnand %p435, %p436
      %p438 = pneg %p437
      // Predicated region
      $region9: #{tpu_custom_call.1} parent=5 // pred_check
        _
      $region10: #{tpu_custom_call.1} parent=5 // pred_check_branch
        %440 = sbr.rel (%p437) target = $region12
      $region11: #{tpu_custom_call.1} parent=5 // pred_region
        %s441 = ssub.s32 %s35, 1
        // Predicated region
        $region13: #{tpu_custom_call.1} parent=11 // pred_check
          %p442 = pneg %p380
        $region14: #{tpu_custom_call.1} parent=11 // pred_check_branch
          %444 = sbr.rel (%p442) target = $region16
        $region15: #{tpu_custom_call.1} parent=11 // pred_region
          _
        $region16: #{tpu_custom_call.1} parent=11 // pred_fallthru
          _
        // Predicated region
        $region17: #{tpu_custom_call.1} parent=11 // pred_check
          %p445 = pneg %p401
        $region18: #{tpu_custom_call.1} parent=11 // pred_check_branch
          %447 = sbr.rel (%p445) target = $region20
        $region19: #{tpu_custom_call.1} parent=11 // pred_region
          _
        $region20: #{tpu_custom_call.1} parent=11 // pred_fallthru
          _
      $region12: #{tpu_custom_call.1} parent=5 // pred_fallthru
        _
      %p448 = scmp.lt.s32.totalorder %s35, 4
      // Predicated region
      $region21: #{tpu_custom_call.1} parent=5 // pred_check
        %p449 = pneg %p448
      $region22: #{tpu_custom_call.1} parent=5 // pred_check_branch
        %451 = sbr.rel (%p449) target = $region24
      $region23: #{tpu_custom_call.1} parent=5 // pred_region
        // Predicated region
        $region25: #{tpu_custom_call.1} parent=23 // pred_check
          %p452 = pneg %p67
        $region26: #{tpu_custom_call.1} parent=23 // pred_check_branch
          %454 = sbr.rel (%p452) target = $region28
        $region27: #{tpu_custom_call.1} parent=23 // pred_region
          %s455 = sand.u32 %s57, 1
          %s456 = scalar_lea.sflag [#allocation4], %s455
          %s457 = sand.u32 %s57, 1
          %s458 = smul.addr %s457, 8
          %s459 = scalar_lea.vmem [#allocation3], %s458
          %s461 = ssub.s32 128, 128
          %462 = vsyncadd %s456, %s461
          %s463 = smul.addr %s42, 128
          %s464 = scalar_lea.hbm %s0, %s463
          %s466 = sshll.u32 %s459, 4
          %s467 = int_to_ptr.vmem [resolvable:$true] %s466
          %469 = dma.hbm_to_vmem [thread:$0]  %s464, 128, %s467, %s456
        $region28: #{tpu_custom_call.1} parent=23 // pred_fallthru
          _
        // Predicated region
        $region29: #{tpu_custom_call.1} parent=23 // pred_check
          %p470 = pneg %p93
        $region30: #{tpu_custom_call.1} parent=23 // pred_check_branch
          %472 = sbr.rel (%p470) target = $region32
        $region31: #{tpu_custom_call.1} parent=23 // pred_region
          %s473 = sand.u32 %s35, 1
          %s474 = scalar_lea.sflag [#allocation7], %s473
          %s475 = sand.u32 %s83, 1
          %s476 = scalar_lea.vmem [#allocation6], %s475
          %s478 = ssub.s32 16, 16
          %479 = vsyncadd %s474, %s478
          %s480 = smul.addr %s42, 16
          %s481 = scalar_lea.hbm %s1, %s480
          %s483 = sshll.u32 %s476, 4
          %s484 = int_to_ptr.vmem [resolvable:$true] %s483
          %486 = dma.hbm_to_vmem [thread:$0]  %s481, 16, %s484, %s474
        $region32: #{tpu_custom_call.1} parent=23 // pred_fallthru
          _
        // Predicated region
        $region33: #{tpu_custom_call.1} parent=23 // pred_check
          %p487 = pneg %p119
        $region34: #{tpu_custom_call.1} parent=23 // pred_check_branch
          %489 = sbr.rel (%p487) target = $region36
        $region35: #{tpu_custom_call.1} parent=23 // pred_region
          %p490 = scmp.lt.s32.totalorder %s43, 1
          %s491 = scalar_select %p490, %s43, 1
          %s492 = smul.addr %s491, 2
          %s493 = scalar_lea.vmem %s2, %s492
        $region36: #{tpu_custom_call.1} parent=23 // pred_fallthru
          _
        // Predicated region
        $region37: #{tpu_custom_call.1} parent=23 // pred_check
          %p494 = pneg %p145
        $region38: #{tpu_custom_call.1} parent=23 // pred_check_branch
          %496 = sbr.rel (%p494) target = $region40
        $region39: #{tpu_custom_call.1} parent=23 // pred_region
          %s497 = sand.u32 %s35, 1
          %s498 = scalar_lea.sflag [#allocation7], %s497
          %s499 = sand.u32 %s135, 1
          %s500 = smul.addr %s499, 2
          %s501 = scalar_lea.vmem [#allocation8], %s500
          %s503 = ssub.s32 32, 32
          %504 = vsyncadd %s498, %s503
          %s505 = smul.addr %s43, 32
          %s506 = scalar_lea.hbm %s3, %s505
          %s508 = sshll.u32 %s501, 4
          %s509 = int_to_ptr.vmem [resolvable:$true] %s508
          %511 = dma.hbm_to_vmem [thread:$0]  %s506, 32, %s509, %s498
        $region40: #{tpu_custom_call.1} parent=23 // pred_fallthru
          _
        // Predicated region
        $region41: #{tpu_custom_call.1} parent=23 // pred_check
          %p512 = pneg %p171
        $region42: #{tpu_custom_call.1} parent=23 // pred_check_branch
          %514 = sbr.rel (%p512) target = $region44
        $region43: #{tpu_custom_call.1} parent=23 // pred_region
          %p515 = scmp.lt.s32.totalorder %s43, 1
          %s516 = scalar_select %p515, %s43, 1
          %s517 = smul.addr %s516, 4
          %s518 = smul.addr %s517, 4
          %s519 = scalar_lea.vmem %s4, %s518
        $region44: #{tpu_custom_call.1} parent=23 // pred_fallthru
          _
        // Predicated region
        $region45: #{tpu_custom_call.1} parent=23 // pred_check
          %p520 = pneg %p197
        $region46: #{tpu_custom_call.1} parent=23 // pred_check_branch
          %522 = sbr.rel (%p520) target = $region48
        $region47: #{tpu_custom_call.1} parent=23 // pred_region
          %s523 = sand.u32 %s35, 1
          %s524 = scalar_lea.sflag [#allocation10], %s523
          %s525 = sand.u32 %s187, 1
          %s526 = scalar_lea.vmem [#allocation9], %s525
          %s528 = ssub.s32 16, 16
          %529 = vsyncadd %s524, %s528
          %s530 = smul.addr %s43, 16
          %s531 = scalar_lea.hbm %s5, %s530
          %s533 = sshll.u32 %s526, 4
          %s534 = int_to_ptr.vmem [resolvable:$true] %s533
          %536 = dma.hbm_to_vmem [thread:$0]  %s531, 16, %s534, %s524
        $region48: #{tpu_custom_call.1} parent=23 // pred_fallthru
          _
        // Predicated region
        $region49: #{tpu_custom_call.1} parent=23 // pred_check
          %p537 = pneg %p223
        $region50: #{tpu_custom_call.1} parent=23 // pred_check_branch
          %539 = sbr.rel (%p537) target = $region52
        $region51: #{tpu_custom_call.1} parent=23 // pred_region
          %p540 = scmp.lt.s32.totalorder %s43, 1
          %s541 = scalar_select %p540, %s43, 1
          %s542 = smul.addr %s541, 4
          %s543 = smul.addr %s542, 4
          %s544 = scalar_lea.vmem %s6, %s543
        $region52: #{tpu_custom_call.1} parent=23 // pred_fallthru
          _
        // Predicated region
        $region53: #{tpu_custom_call.1} parent=23 // pred_check
          %p545 = pneg %p249
        $region54: #{tpu_custom_call.1} parent=23 // pred_check_branch
          %547 = sbr.rel (%p545) target = $region56
        $region55: #{tpu_custom_call.1} parent=23 // pred_region
          %s548 = sand.u32 %s35, 1
          %s549 = scalar_lea.sflag [#allocation10], %s548
          %s550 = sand.u32 %s239, 1
          %s551 = scalar_lea.vmem [#allocation11], %s550
          %s553 = ssub.s32 16, 16
          %554 = vsyncadd %s549, %s553
          %s555 = smul.addr %s43, 16
          %s556 = scalar_lea.hbm %s7, %s555
          %s558 = sshll.u32 %s551, 4
          %s559 = int_to_ptr.vmem [resolvable:$true] %s558
          %561 = dma.hbm_to_vmem [thread:$0]  %s556, 16, %s559, %s549
        $region56: #{tpu_custom_call.1} parent=23 // pred_fallthru
          _
        // Predicated region
        $region57: #{tpu_custom_call.1} parent=23 // pred_check
          %p562 = pneg %p275
        $region58: #{tpu_custom_call.1} parent=23 // pred_check_branch
          %564 = sbr.rel (%p562) target = $region60
        $region59: #{tpu_custom_call.1} parent=23 // pred_region
          %p565 = scmp.lt.s32.totalorder %s43, 1
          %s566 = scalar_select %p565, %s43, 1
          %s567 = smul.addr %s566, 4
          %s568 = smul.addr %s567, 4
          %s569 = scalar_lea.vmem %s8, %s568
        $region60: #{tpu_custom_call.1} parent=23 // pred_fallthru
          _
        // Predicated region
        $region61: #{tpu_custom_call.1} parent=23 // pred_check
          %p570 = pneg %p301
        $region62: #{tpu_custom_call.1} parent=23 // pred_check_branch
          %572 = sbr.rel (%p570) target = $region64
        $region63: #{tpu_custom_call.1} parent=23 // pred_region
          %s573 = sand.u32 %s291, 1
          %s574 = scalar_lea.sflag [#allocation13], %s573
          %s575 = sand.u32 %s291, 1
          %s576 = scalar_lea.vmem [#allocation12], %s575
          %s578 = ssub.s32 16, 16
          %579 = vsyncadd %s574, %s578
          %s580 = smul.addr %s43, 16
          %s581 = scalar_lea.hbm %s9, %s580
          %s583 = sshll.u32 %s576, 4
          %s584 = int_to_ptr.vmem [resolvable:$true] %s583
          %586 = dma.hbm_to_vmem [thread:$0]  %s581, 16, %s584, %s574
        $region64: #{tpu_custom_call.1} parent=23 // pred_fallthru
          _
        // Predicated region
        $region65: #{tpu_custom_call.1} parent=23 // pred_check
          %p587 = pneg %p327
        $region66: #{tpu_custom_call.1} parent=23 // pred_check_branch
          %589 = sbr.rel (%p587) target = $region68
        $region67: #{tpu_custom_call.1} parent=23 // pred_region
          %p590 = scmp.lt.s32.totalorder %s43, 1
          %s591 = scalar_select %p590, %s43, 1
          %s592 = smul.addr %s591, 8
          %s593 = smul.addr %s592, 4
          %s594 = scalar_lea.vmem %s10, %s593
        $region68: #{tpu_custom_call.1} parent=23 // pred_fallthru
          _
        // Predicated region
        $region69: #{tpu_custom_call.1} parent=23 // pred_check
          %p595 = pneg %p353
        $region70: #{tpu_custom_call.1} parent=23 // pred_check_branch
          %597 = sbr.rel (%p595) target = $region72
        $region71: #{tpu_custom_call.1} parent=23 // pred_region
          %p598 = scmp.lt.s32.totalorder %s43, 1
          %s599 = scalar_select %p598, %s43, 1
          %s600 = scalar_lea.vmem %s11, %s599
        $region72: #{tpu_custom_call.1} parent=23 // pred_fallthru
          _
      $region24: #{tpu_custom_call.1} parent=5 // pred_fallthru
        _
      %p601 = scmp.le.s32.totalorder 1, %s35
      %p602 = scmp.lt.s32.totalorder %s35, 5
      %p603 = pnand %p601, %p602
      %p604 = pneg %p603
      // Predicated region
      $region73: #{tpu_custom_call.1} parent=5 // pred_check
        _
      $region74: #{tpu_custom_call.1} parent=5 // pred_check_branch
        %606 = sbr.rel (%p603) target = $region76
      $region75: #{tpu_custom_call.1} parent=5 // pred_region
        %s607 = ssub.s32 %s35, 1
        %s608 = sand.u32 %s60, 1
        %s609 = scalar_lea.sflag [#allocation4], %s608
        %s610 = sand.u32 %s60, 1
        %s611 = smul.addr %s610, 8
        %s612 = scalar_lea.vmem [#allocation3], %s611
        // Predicated region
        $region77: #{tpu_custom_call.1} parent=75 // pred_check
          %p613 = pneg %p73
        $region78: #{tpu_custom_call.1} parent=75 // pred_check_branch
          %615 = sbr.rel (%p613) target = $region80
        $region79: #{tpu_custom_call.1} parent=75 // pred_region
          %616 = dma.done %s609, 128
        $region80: #{tpu_custom_call.1} parent=75 // pred_fallthru
          _
        %s617 = sand.u32 %s40, 1
        %s618 = scalar_lea.sflag [#allocation7], %s617
        %s619 = sand.u32 %s86, 1
        %s620 = scalar_lea.vmem [#allocation6], %s619
        // Predicated region
        $region81: #{tpu_custom_call.1} parent=75 // pred_check
          %p621 = pneg %p99
        $region82: #{tpu_custom_call.1} parent=75 // pred_check_branch
          %623 = sbr.rel (%p621) target = $region84
        $region83: #{tpu_custom_call.1} parent=75 // pred_region
          %624 = dma.done %s618, 16
        $region84: #{tpu_custom_call.1} parent=75 // pred_fallthru
          _
        %s625 = sand.u32 %s40, 1
        %s626 = scalar_lea.sflag [#allocation7], %s625
        %s627 = sand.u32 %s138, 1
        %s628 = smul.addr %s627, 2
        %s629 = scalar_lea.vmem [#allocation8], %s628
        // Predicated region
        $region85: #{tpu_custom_call.1} parent=75 // pred_check
          %p630 = pneg %p151
        $region86: #{tpu_custom_call.1} parent=75 // pred_check_branch
          %632 = sbr.rel (%p630) target = $region88
        $region87: #{tpu_custom_call.1} parent=75 // pred_region
          %633 = dma.done %s626, 32
        $region88: #{tpu_custom_call.1} parent=75 // pred_fallthru
          _
        %s634 = sand.u32 %s40, 1
        %s635 = scalar_lea.sflag [#allocation10], %s634
        %s636 = sand.u32 %s190, 1
        %s637 = scalar_lea.vmem [#allocation9], %s636
        // Predicated region
        $region89: #{tpu_custom_call.1} parent=75 // pred_check
          %p638 = pneg %p203
        $region90: #{tpu_custom_call.1} parent=75 // pred_check_branch
          %640 = sbr.rel (%p638) target = $region92
        $region91: #{tpu_custom_call.1} parent=75 // pred_region
          %641 = dma.done %s635, 16
        $region92: #{tpu_custom_call.1} parent=75 // pred_fallthru
          _
        %s642 = sand.u32 %s40, 1
        %s643 = scalar_lea.sflag [#allocation10], %s642
        %s644 = sand.u32 %s242, 1
        %s645 = scalar_lea.vmem [#allocation11], %s644
        // Predicated region
        $region93: #{tpu_custom_call.1} parent=75 // pred_check
          %p646 = pneg %p255
        $region94: #{tpu_custom_call.1} parent=75 // pred_check_branch
          %648 = sbr.rel (%p646) target = $region96
        $region95: #{tpu_custom_call.1} parent=75 // pred_region
          %649 = dma.done %s643, 16
        $region96: #{tpu_custom_call.1} parent=75 // pred_fallthru
          _
        %s650 = sand.u32 %s294, 1
        %s651 = scalar_lea.sflag [#allocation13], %s650
        %s652 = sand.u32 %s294, 1
        %s653 = scalar_lea.vmem [#allocation12], %s652
        // Predicated region
        $region97: #{tpu_custom_call.1} parent=75 // pred_check
          %p654 = pneg %p307
        $region98: #{tpu_custom_call.1} parent=75 // pred_check_branch
          %656 = sbr.rel (%p654) target = $region100
        $region99: #{tpu_custom_call.1} parent=75 // pred_region
          %657 = dma.done %s651, 16
        $region100: #{tpu_custom_call.1} parent=75 // pred_fallthru
          _
        %s658 = sand.u32 %s60, 1
        %s659 = scalar_lea.sflag [#allocation4], %s658
        %s660 = sand.u32 %s60, 1
        %s661 = smul.addr %s660, 8
        %s662 = scalar_lea.vmem [#allocation3], %s661
        %p663 = pneg %p73
        %p664 = pneg %p70
        %s665 = sand.u32 %s40, 1
        %s666 = scalar_lea.sflag [#allocation7], %s665
        %s667 = sand.u32 %s86, 1
        %s668 = scalar_lea.vmem [#allocation6], %s667
        %p669 = pneg %p99
        %p670 = pneg %p96
        %p671 = scmp.lt.s32.totalorder %s45, 1
        %s672 = scalar_select %p671, %s45, 1
        %s673 = smul.addr %s672, 2
        %s674 = scalar_lea.vmem %s2, %s673
        %p675 = pneg %p125
        %p676 = pneg %p122
        %s677 = sand.u32 %s40, 1
        %s678 = scalar_lea.sflag [#allocation7], %s677
        %s679 = sand.u32 %s138, 1
        %s680 = smul.addr %s679, 2
        %s681 = scalar_lea.vmem [#allocation8], %s680
        %p682 = pneg %p151
        %p683 = pneg %p148
        %p684 = scmp.lt.s32.totalorder %s45, 1
        %s685 = scalar_select %p684, %s45, 1
        %s686 = smul.addr %s685, 4
        %s687 = smul.addr %s686, 4
        %s688 = scalar_lea.vmem %s4, %s687
        %p689 = pneg %p177
        %p690 = pneg %p174
        %s691 = sand.u32 %s40, 1
        %s692 = scalar_lea.sflag [#allocation10], %s691
        %s693 = sand.u32 %s190, 1
        %s694 = scalar_lea.vmem [#allocation9], %s693
        %p695 = pneg %p203
        %p696 = pneg %p200
        %p697 = scmp.lt.s32.totalorder %s45, 1
        %s698 = scalar_select %p697, %s45, 1
        %s699 = smul.addr %s698, 4
        %s700 = smul.addr %s699, 4
        %s701 = scalar_lea.vmem %s6, %s700
        %p702 = pneg %p229
        %p703 = pneg %p226
        %s704 = sand.u32 %s40, 1
        %s705 = scalar_lea.sflag [#allocation10], %s704
        %s706 = sand.u32 %s242, 1
        %s707 = scalar_lea.vmem [#allocation11], %s706
        %p708 = pneg %p255
        %p709 = pneg %p252
        %p710 = scmp.lt.s32.totalorder %s45, 1
        %s711 = scalar_select %p710, %s45, 1
        %s712 = smul.addr %s711, 4
        %s713 = smul.addr %s712, 4
        %s714 = scalar_lea.vmem %s8, %s713
        %p715 = pneg %p281
        %p716 = pneg %p278
        %s717 = sand.u32 %s294, 1
        %s718 = scalar_lea.sflag [#allocation13], %s717
        %s719 = sand.u32 %s294, 1
        %s720 = scalar_lea.vmem [#allocation12], %s719
        %p721 = pneg %p307
        %p722 = pneg %p304
        %p723 = scmp.lt.s32.totalorder %s45, 1
        %s724 = scalar_select %p723, %s45, 1
        %s725 = smul.addr %s724, 8
        %s726 = smul.addr %s725, 4
        %s727 = scalar_lea.vmem %s10, %s726
        %p728 = pneg %p333
        %p729 = pneg %p330
        %p730 = scmp.lt.s32.totalorder %s45, 1
        %s731 = scalar_select %p730, %s45, 1
        %s732 = scalar_lea.vmem %s11, %s731
        %p733 = pneg %p359
        %p734 = pneg %p356
        %p735 = pneg %p380
        %p736 = pneg %p377
        %p737 = pneg %p401
        %p738 = pneg %p398
        %p739 = pneg %p427
        %p740 = pneg %p424
        %s741 = sand.u32 %s414, 1
        %s742 = scalar_lea.sflag [#allocation5], %s741
        %s743 = sand.u32 %s414, 1
        %s744 = smul.addr %s743, 8
        %s745 = scalar_lea.vmem [#allocation14], %s744
        %p746 = scmp.lt.s32.totalorder %s45, 1
        %s747 = scalar_select %p746, %s45, 1
        %s748 = smul.addr %s747, 2
        %s749 = scalar_lea.vmem %s2, %s748
        %p750 = scmp.lt.s32.totalorder %s45, 1
        %s751 = scalar_select %p750, %s45, 1
        %s752 = smul.addr %s751, 4
        %s753 = smul.addr %s752, 4
        %s754 = scalar_lea.vmem %s4, %s753
        %p755 = scmp.lt.s32.totalorder %s45, 1
        %s756 = scalar_select %p755, %s45, 1
        %s757 = smul.addr %s756, 4
        %s758 = smul.addr %s757, 4
        %s759 = scalar_lea.vmem %s6, %s758
        %p760 = scmp.lt.s32.totalorder %s45, 1
        %s761 = scalar_select %p760, %s45, 1
        %s762 = smul.addr %s761, 4
        %s763 = smul.addr %s762, 4
        %s764 = scalar_lea.vmem %s8, %s763
        %p765 = scmp.lt.s32.totalorder %s45, 1
        %s766 = scalar_select %p765, %s45, 1
        %s767 = smul.addr %s766, 8
        %s768 = smul.addr %s767, 4
        %s769 = scalar_lea.vmem %s10, %s768
        %p770 = scmp.lt.s32.totalorder %s45, 1
        %s771 = scalar_select %p770, %s45, 1
        %s772 = scalar_lea.vmem %s11, %s771
        %p774 = scmp.eq.s32.totalorder %s45, 0
        // Predicated region
        $region101: #{tpu_custom_call.1} parent=75 // pred_check
          %p775 = pneg %p774
        $region102: #{tpu_custom_call.1} parent=75 // pred_check_branch
          %777 = sbr.rel (%p775) target = $region104
        $region103: #{tpu_custom_call.1} parent=75 // pred_region
          %v778 = vld [vmem:[%s612] sm:$0xff]
          %vm779 = vcmask 261120
          %780 = vst.msk [vmem:[#allocation2] sm:$0xff] %vm779, %v778
        $region104: #{tpu_custom_call.1} parent=75 // pred_fallthru
          _
        %v781 = vld [vmem:[#allocation2] sm:$0xff]
        %v782 = vld [vmem:[%s620] sm:$0x1]
        %v783 = vld [vmem:[%s749] sm:$0x3]
        %v784 = vld [vmem:[%s629] sm:$0x3]
        %vm785 = vcmask 261120
        %v786 = vsel %vm785, %v781, 0.0
        %787 = vadd.xlane.f32.xlu0 %v786
        %v788 = vpop.xlane.xlu0 %787
        %v789 = vrcp.pop 32.0
        %v790 = vmul.f32 %v788, %v789
        %v791 = vsub.f32 %v781, %v790
        %v792 = vmul.f32 %v791, %v791
        %v793 = vsel %vm785, %v792, 0.0
        %794 = vadd.xlane.f32.xlu0 %v793
        %v795 = vpop.xlane.xlu0 %794
        %v796 = vmul.f32 %v795, 0.032258064
        %v797 = vrsqrt.pop %v796
        %v798 = vmul.f32 %v796, %v797
        %vm799 = vcmp.eq.f32.partialorder %v796, inf
        %v800 = vsel %vm799, %v796, %v798
        %vm801 = vcmp.eq.f32.partialorder %v796, 0.0
        %v802 = vand.u32 %v796, 2147483648
        %v803 = vsel %vm801, %v802, %v800
        %v804 = vlaneseq
        %v805 = vshrl.u32 %v804, 7
        %v806 = vsub.s32 0, %v805
        %v807 = vrot.slane %v783, %v806
        %v808 = vmul.f32 %v807, %v791
        %v809 = vadd.f32 %v803, 1e-06
        %v810 = vrcp.pop %v809
        %v811 = vmul.f32 %v808, %v810
        %v812 = vlaneseq
        %v813 = vshrl.u32 %v812, 7
        %v814 = vsub.s32 0, %v813
        %v815 = vrot.slane %v784, %v814
        %v816 = vadd.f32 %v811, %v815
        %v817 = vld [vmem:[%s754] sm:$0xf]
        %v818 = vld [vmem:[%s754 + $0x4] sm:$0xf]
        %v819 = vld [vmem:[%s754 + $0x8] sm:$0xf]
        %v820 = vld [vmem:[%s754 + $0xc] sm:$0xf]
        %v821 = vld [vmem:[%s637] sm:$0x1]
        %v822 = vld [vmem:[%s759] sm:$0xf]
        %v823 = vld [vmem:[%s759 + $0x4] sm:$0xf]
        %v824 = vld [vmem:[%s759 + $0x8] sm:$0xf]
        %v825 = vld [vmem:[%s759 + $0xc] sm:$0xf]
        %v826 = vld [vmem:[%s645] sm:$0x1]
        %v827 = vpack.c.bf16 %v816, %v816
        %v829 = vlaneseq
        %v830 = vshrl.u32 %v829, 7
        %v831 = vsub.s32 0, %v830
        %v832 = vrot.slane %v821, %v831
        %v838 = vunpack.c.l.b16 %v817
        %v839 = vunpack.c.l.b16 %v818
        %v840 = vunpack.c.l.b16 %v819
        %v841 = vunpack.c.l.b16 %v820
        %v842 = vpack.c.b16 %v839, %v838
        %v843 = vpack.c.b16 %v841, %v840
        %v847 = vsel %vm785, %v827, 0
        %849 = vmatprep.subr.bf16.mxu0 0
        %850 = vmatpush1.bf16.msra.mxu0 %v842
        %851 = vmatprep.subr.bf16.mxu0 0
        %852 = vmatpush1.bf16.msra.mxu0 %v843
        %853 = vmatprep.subr.bf16.mxu0 0
        %854 = vmatpush1.bf16.msra.mxu0 0
        %855 = vmatprep.subr.bf16.mxu0 0
        %856 = vmatpush1.bf16.msra.mxu0 0
        %857 = vmatprep.subr.bf16.mxu0 0
        %858 = vmatpush1.bf16.msra.mxu0 0
        %859 = vmatprep.subr.bf16.mxu0 0
        %860 = vmatpush1.bf16.msra.mxu0 0
        %861 = vmatprep.subr.bf16.mxu0 0
        %862 = vmatpush1.bf16.msra.mxu0 0
        %863 = vmatprep.subr.bf16.mxu0 0
        %864 = vmatpush1.bf16.msra.mxu0 0
        %865 = vmatprep.subr.bf16.mxu0 0
        %866 = vmatpush1.bf16.msra.mxu0 0
        %867 = vmatprep.subr.bf16.mxu0 0
        %868 = vmatpush1.bf16.msra.mxu0 0
        %869 = vmatprep.subr.bf16.mxu0 0
        %870 = vmatpush1.bf16.msra.mxu0 0
        %871 = vmatprep.subr.bf16.mxu0 0
        %872 = vmatpush1.bf16.msra.mxu0 0
        %873 = vmatprep.subr.bf16.mxu0 0
        %874 = vmatpush1.bf16.msra.mxu0 0
        %875 = vmatprep.subr.bf16.mxu0 0
        %876 = vmatpush1.bf16.msra.mxu0 0
        %877 = vmatprep.subr.bf16.mxu0 0
        %878 = vmatpush1.bf16.msra.mxu0 0
        %879 = vmatprep.subr.bf16.mxu0 0
        %880 = vmatpush1.bf16.msra.mxu0 0
        %881 = vmatprep.mubr.bf16.mxu0 0
        %882 = vmatmul.mubr.bf16.gmra.mrb[0].mxu0 %v847
        %v883 = vpop.f32.mrb[0].mxu0
        %v884 = vadd.f32 %v832, %v883
        %v885 = vpop.f32.mrb[0].mxu0
        %v886 = vpop.f32.mrb[0].mxu0
        %v887 = vpop.f32.mrb[0].mxu0
        %888 = vdwg.mxu0
        %v889 = vpack.c.bf16 %v884, %v884
        %891 = vrot.lane.b32.xlu0 %v889, 96
        %v892 = vpop.permute.xlu0 %891
        %vm893 = vcmask 64512
        %v895 = vsel %vm893, %v889, 0
        %v898 = vsel %vm893, %v892, 0
        %900 = vmatprep.subr.bf16.mxu0 0
        %901 = vmatpush1.bf16.xpose.msra.mxu0 %v898
        %902 = vmatprep.subr.bf16.mxu0 0
        %903 = vmatpush1.bf16.xpose.msra.mxu0 0
        %904 = vmatprep.subr.bf16.mxu0 0
        %905 = vmatpush1.bf16.xpose.msra.mxu0 0
        %906 = vmatprep.subr.bf16.mxu0 0
        %907 = vmatpush1.bf16.xpose.msra.mxu0 0
        %908 = vmatprep.subr.bf16.mxu0 0
        %909 = vmatpush1.bf16.xpose.msra.mxu0 0
        %910 = vmatprep.subr.bf16.mxu0 0
        %911 = vmatpush1.bf16.xpose.msra.mxu0 0
        %912 = vmatprep.subr.bf16.mxu0 0
        %913 = vmatpush1.bf16.xpose.msra.mxu0 0
        %914 = vmatprep.subr.bf16.mxu0 0
        %915 = vmatpush1.bf16.xpose.msra.mxu0 0
        %916 = vmatprep.subr.bf16.mxu0 0
        %917 = vmatpush1.bf16.xpose.msra.mxu0 0
        %918 = vmatprep.subr.bf16.mxu0 0
        %919 = vmatpush1.bf16.xpose.msra.mxu0 0
        %920 = vmatprep.subr.bf16.mxu0 0
        %921 = vmatpush1.bf16.xpose.msra.mxu0 0
        %922 = vmatprep.subr.bf16.mxu0 0
        %923 = vmatpush1.bf16.xpose.msra.mxu0 0
        %924 = vmatprep.subr.bf16.mxu0 0
        %925 = vmatpush1.bf16.xpose.msra.mxu0 0
        %926 = vmatprep.subr.bf16.mxu0 0
        %927 = vmatpush1.bf16.xpose.msra.mxu0 0
        %928 = vmatprep.subr.bf16.mxu0 0
        %929 = vmatpush1.bf16.xpose.msra.mxu0 0
        %930 = vmatprep.subr.bf16.mxu0 0
        %931 = vmatpush1.bf16.xpose.msra.mxu0 0
        %932 = vmatprep.mubr.bf16.mxu0 0
        %933 = vmatmul.mubr.bf16.gmra.mrb[0].mxu0 %v895
        %v934 = vpop.f32.mrb[0].mxu0
        %v935 = vadd.f32 0.0, %v934
        %v936 = vpop.f32.mrb[0].mxu0
        %v937 = vpop.f32.mrb[0].mxu0
        %v938 = vpop.f32.mrb[0].mxu0
        %939 = vdwg.mxu0
        %v940 = vmul.f32 %v935, 0.35355338
        %vm941 = vcmp.eq.f32.partialorder %v782, 0.0
        %v942 = vsel %vm941, 1, 0
        %v943 = vlaneseq
        %v944 = vshrl.u32 %v943, 7
        %v945 = vsub.s32 0, %v944
        %v946 = vrot.slane %v942, %v945
        %vm947 = vcmp.eq.s32.totalorder %v946, 1
        %v948 = vsel %vm947, -1e+09, %v940
        %v949 = vsel %vm893, %v948, -inf
        %950 = vmax.xlane.f32.xlu0 %v949
        %v951 = vpop.xlane.xlu0 %950
        %v952 = vsub.f32 %v948, %v951
        %v953 = vmul.f32 %v952, 1.442695
        %v954 = vpow.pop %v953
        %v955 = vsel %vm893, %v954, 0.0
        %956 = vadd.xlane.f32.xlu0 %v955
        %v957 = vpop.xlane.xlu0 %956
        %v958 = vrcp.pop %v957
        %v959 = vmul.f32 %v954, %v958
        %v960 = vpack.c.bf16 %v959, %v959
        %961 = vrot.lane.b32.xlu0 %v889, 64
        %v962 = vpop.permute.xlu0 %961
        %v964 = vsel %vm893, %v960, 0
        %vm966 = vcmask 1043456
        %v968 = vsel %vm966, %v962, 0
        %970 = vmatprep.subr.bf16.mxu0 0
        %971 = vmatpush1.bf16.msra.mxu0 %v968
        %972 = vmatprep.subr.bf16.mxu0 0
        %973 = vmatpush1.bf16.msra.mxu0 0
        %974 = vmatprep.subr.bf16.mxu0 0
        %975 = vmatpush1.bf16.msra.mxu0 0
        %976 = vmatprep.subr.bf16.mxu0 0
        %977 = vmatpush1.bf16.msra.mxu0 0
        %978 = vmatprep.subr.bf16.mxu0 0
        %979 = vmatpush1.bf16.msra.mxu0 0
        %980 = vmatprep.subr.bf16.mxu0 0
        %981 = vmatpush1.bf16.msra.mxu0 0
        %982 = vmatprep.subr.bf16.mxu0 0
        %983 = vmatpush1.bf16.msra.mxu0 0
        %984 = vmatprep.subr.bf16.mxu0 0
        %985 = vmatpush1.bf16.msra.mxu0 0
        %986 = vmatprep.subr.bf16.mxu0 0
        %987 = vmatpush1.bf16.msra.mxu0 0
        %988 = vmatprep.subr.bf16.mxu0 0
        %989 = vmatpush1.bf16.msra.mxu0 0
        %990 = vmatprep.subr.bf16.mxu0 0
        %991 = vmatpush1.bf16.msra.mxu0 0
        %992 = vmatprep.subr.bf16.mxu0 0
        %993 = vmatpush1.bf16.msra.mxu0 0
        %994 = vmatprep.subr.bf16.mxu0 0
        %995 = vmatpush1.bf16.msra.mxu0 0
        %996 = vmatprep.subr.bf16.mxu0 0
        %997 = vmatpush1.bf16.msra.mxu0 0
        %998 = vmatprep.subr.bf16.mxu0 0
        %999 = vmatpush1.bf16.msra.mxu0 0
        %1000 = vmatprep.subr.bf16.mxu0 0
        %1001 = vmatpush1.bf16.msra.mxu0 0
        %1002 = vmatprep.mubr.bf16.mxu0 0
        %1003 = vmatmul.mubr.bf16.gmra.mrb[0].mxu0 %v964
        %v1004 = vpop.f32.mrb[0].mxu0
        %v1005 = vadd.f32 0.0, %v1004
        %v1006 = vpop.f32.mrb[0].mxu0
        %v1007 = vpop.f32.mrb[0].mxu0
        %v1008 = vpop.f32.mrb[0].mxu0
        %1009 = vdwg.mxu0
        %1010 = vrot.lane.b32.xlu0 %v889, 120
        %v1011 = vpop.permute.xlu0 %1010
        %1012 = vrot.lane.b32.xlu0 %v889, 88
        %v1013 = vpop.permute.xlu0 %1012
        %v1015 = vsel %vm893, %v1011, 0
        %v1018 = vsel %vm893, %v1013, 0
        %1020 = vmatprep.subr.bf16.mxu0 0
        %1021 = vmatpush1.bf16.xpose.msra.mxu0 %v1018
        %1022 = vmatprep.subr.bf16.mxu0 0
        %1023 = vmatpush1.bf16.xpose.msra.mxu0 0
        %1024 = vmatprep.subr.bf16.mxu0 0
        %1025 = vmatpush1.bf16.xpose.msra.mxu0 0
        %1026 = vmatprep.subr.bf16.mxu0 0
        %1027 = vmatpush1.bf16.xpose.msra.mxu0 0
        %1028 = vmatprep.subr.bf16.mxu0 0
        %1029 = vmatpush1.bf16.xpose.msra.mxu0 0
        %1030 = vmatprep.subr.bf16.mxu0 0
        %1031 = vmatpush1.bf16.xpose.msra.mxu0 0
        %1032 = vmatprep.subr.bf16.mxu0 0
        %1033 = vmatpush1.bf16.xpose.msra.mxu0 0
        %1034 = vmatprep.subr.bf16.mxu0 0
        %1035 = vmatpush1.bf16.xpose.msra.mxu0 0
        %1036 = vmatprep.subr.bf16.mxu0 0
        %1037 = vmatpush1.bf16.xpose.msra.mxu0 0
        %1038 = vmatprep.subr.bf16.mxu0 0
        %1039 = vmatpush1.bf16.xpose.msra.mxu0 0
        %1040 = vmatprep.subr.bf16.mxu0 0
        %1041 = vmatpush1.bf16.xpose.msra.mxu0 0
        %1042 = vmatprep.subr.bf16.mxu0 0
        %1043 = vmatpush1.bf16.xpose.msra.mxu0 0
        %1044 = vmatprep.subr.bf16.mxu0 0
        %1045 = vmatpush1.bf16.xpose.msra.mxu0 0
        %1046 = vmatprep.subr.bf16.mxu0 0
        %1047 = vmatpush1.bf16.xpose.msra.mxu0 0
        %1048 = vmatprep.subr.bf16.mxu0 0
        %1049 = vmatpush1.bf16.xpose.msra.mxu0 0
        %1050 = vmatprep.subr.bf16.mxu0 0
        %1051 = vmatpush1.bf16.xpose.msra.mxu0 0
        %1052 = vmatprep.mubr.bf16.mxu0 0
        %1053 = vmatmul.mubr.bf16.gmra.mrb[0].mxu0 %v1015
        %v1054 = vpop.f32.mrb[0].mxu0
        %v1055 = vadd.f32 0.0, %v1054
        %v1056 = vpop.f32.mrb[0].mxu0
        %v1057 = vpop.f32.mrb[0].mxu0
        %v1058 = vpop.f32.mrb[0].mxu0
        %1059 = vdwg.mxu0
        %v1060 = vmul.f32 %v1055, 0.35355338
        %v1061 = vsel %vm947, -1e+09, %v1060
        %v1062 = vsel %vm893, %v1061, -inf
        %1063 = vmax.xlane.f32.xlu0 %v1062
        %v1064 = vpop.xlane.xlu0 %1063
        %v1065 = vsub.f32 %v1061, %v1064
        %v1066 = vmul.f32 %v1065, 1.442695
        %v1067 = vpow.pop %v1066
        %v1068 = vsel %vm893, %v1067, 0.0
        %1069 = vadd.xlane.f32.xlu0 %v1068
        %v1070 = vpop.xlane.xlu0 %1069
        %v1071 = vrcp.pop %v1070
        %v1072 = vmul.f32 %v1067, %v1071
        %v1073 = vpack.c.bf16 %v1072, %v1072
        %1074 = vrot.lane.b32.xlu0 %v889, 56
        %v1075 = vpop.permute.xlu0 %1074
        %v1077 = vsel %vm893, %v1073, 0
        %v1080 = vsel %vm966, %v1075, 0
        %1082 = vmatprep.subr.bf16.mxu0 0
        %1083 = vmatpush1.bf16.msra.mxu0 %v1080
        %1084 = vmatprep.subr.bf16.mxu0 0
        %1085 = vmatpush1.bf16.msra.mxu0 0
        %1086 = vmatprep.subr.bf16.mxu0 0
        %1087 = vmatpush1.bf16.msra.mxu0 0
        %1088 = vmatprep.subr.bf16.mxu0 0
        %1089 = vmatpush1.bf16.msra.mxu0 0
        %1090 = vmatprep.subr.bf16.mxu0 0
        %1091 = vmatpush1.bf16.msra.mxu0 0
        %1092 = vmatprep.subr.bf16.mxu0 0
        %1093 = vmatpush1.bf16.msra.mxu0 0
        %1094 = vmatprep.subr.bf16.mxu0 0
        %1095 = vmatpush1.bf16.msra.mxu0 0
        %1096 = vmatprep.subr.bf16.mxu0 0
        %1097 = vmatpush1.bf16.msra.mxu0 0
        %1098 = vmatprep.subr.bf16.mxu0 0
        %1099 = vmatpush1.bf16.msra.mxu0 0
        %1100 = vmatprep.subr.bf16.mxu0 0
        %1101 = vmatpush1.bf16.msra.mxu0 0
        %1102 = vmatprep.subr.bf16.mxu0 0
        %1103 = vmatpush1.bf16.msra.mxu0 0
        %1104 = vmatprep.subr.bf16.mxu0 0
        %1105 = vmatpush1.bf16.msra.mxu0 0
        %1106 = vmatprep.subr.bf16.mxu0 0
        %1107 = vmatpush1.bf16.msra.mxu0 0
        %1108 = vmatprep.subr.bf16.mxu0 0
        %1109 = vmatpush1.bf16.msra.mxu0 0
        %1110 = vmatprep.subr.bf16.mxu0 0
        %1111 = vmatpush1.bf16.msra.mxu0 0
        %1112 = vmatprep.subr.bf16.mxu0 0
        %1113 = vmatpush1.bf16.msra.mxu0 0
        %1114 = vmatprep.mubr.bf16.mxu0 0
        %1115 = vmatmul.mubr.bf16.gmra.mrb[0].mxu0 %v1077
        %v1116 = vpop.f32.mrb[0].mxu0
        %v1117 = vadd.f32 0.0, %v1116
        %v1118 = vpop.f32.mrb[0].mxu0
        %v1119 = vpop.f32.mrb[0].mxu0
        %v1120 = vpop.f32.mrb[0].mxu0
        %1121 = vdwg.mxu0
        %1122 = vrot.lane.b32.xlu0 %v889, 112
        %v1123 = vpop.permute.xlu0 %1122
        %1124 = vrot.lane.b32.xlu0 %v889, 80
        %v1125 = vpop.permute.xlu0 %1124
        %v1127 = vsel %vm893, %v1123, 0
        %v1130 = vsel %vm893, %v1125, 0
        %1132 = vmatprep.subr.bf16.mxu0 0
        %1133 = vmatpush1.bf16.xpose.msra.mxu0 %v1130
        %1134 = vmatprep.subr.bf16.mxu0 0
        %1135 = vmatpush1.bf16.xpose.msra.mxu0 0
        %1136 = vmatprep.subr.bf16.mxu0 0
        %1137 = vmatpush1.bf16.xpose.msra.mxu0 0
        %1138 = vmatprep.subr.bf16.mxu0 0
        %1139 = vmatpush1.bf16.xpose.msra.mxu0 0
        %1140 = vmatprep.subr.bf16.mxu0 0
        %1141 = vmatpush1.bf16.xpose.msra.mxu0 0
        %1142 = vmatprep.subr.bf16.mxu0 0
        %1143 = vmatpush1.bf16.xpose.msra.mxu0 0
        %1144 = vmatprep.subr.bf16.mxu0 0
        %1145 = vmatpush1.bf16.xpose.msra.mxu0 0
        %1146 = vmatprep.subr.bf16.mxu0 0
        %1147 = vmatpush1.bf16.xpose.msra.mxu0 0
        %1148 = vmatprep.subr.bf16.mxu0 0
        %1149 = vmatpush1.bf16.xpose.msra.mxu0 0
        %1150 = vmatprep.subr.bf16.mxu0 0
        %1151 = vmatpush1.bf16.xpose.msra.mxu0 0
        %1152 = vmatprep.subr.bf16.mxu0 0
        %1153 = vmatpush1.bf16.xpose.msra.mxu0 0
        %1154 = vmatprep.subr.bf16.mxu0 0
        %1155 = vmatpush1.bf16.xpose.msra.mxu0 0
        %1156 = vmatprep.subr.bf16.mxu0 0
        %1157 = vmatpush1.bf16.xpose.msra.mxu0 0
        %1158 = vmatprep.subr.bf16.mxu0 0
        %1159 = vmatpush1.bf16.xpose.msra.mxu0 0
        %1160 = vmatprep.subr.bf16.mxu0 0
        %1161 = vmatpush1.bf16.xpose.msra.mxu0 0
        %1162 = vmatprep.subr.bf16.mxu0 0
        %1163 = vmatpush1.bf16.xpose.msra.mxu0 0
        %1164 = vmatprep.mubr.bf16.mxu0 0
        %1165 = vmatmul.mubr.bf16.gmra.mrb[0].mxu0 %v1127
        %v1166 = vpop.f32.mrb[0].mxu0
        %v1167 = vadd.f32 0.0, %v1166
        %v1168 = vpop.f32.mrb[0].mxu0
        %v1169 = vpop.f32.mrb[0].mxu0
        %v1170 = vpop.f32.mrb[0].mxu0
        %1171 = vdwg.mxu0
        %v1172 = vmul.f32 %v1167, 0.35355338
        %v1173 = vsel %vm947, -1e+09, %v1172
        %v1174 = vsel %vm893, %v1173, -inf
        %1175 = vmax.xlane.f32.xlu0 %v1174
        %v1176 = vpop.xlane.xlu0 %1175
        %v1177 = vsub.f32 %v1173, %v1176
        %v1178 = vmul.f32 %v1177, 1.442695
        %v1179 = vpow.pop %v1178
        %v1180 = vsel %vm893, %v1179, 0.0
        %1181 = vadd.xlane.f32.xlu0 %v1180
        %v1182 = vpop.xlane.xlu0 %1181
        %v1183 = vrcp.pop %v1182
        %v1184 = vmul.f32 %v1179, %v1183
        %v1185 = vpack.c.bf16 %v1184, %v1184
        %1186 = vrot.lane.b32.xlu0 %v889, 48
        %v1187 = vpop.permute.xlu0 %1186
        %v1189 = vsel %vm893, %v1185, 0
        %v1192 = vsel %vm966, %v1187, 0
        %1194 = vmatprep.subr.bf16.mxu0 0
        %1195 = vmatpush1.bf16.msra.mxu0 %v1192
        %1196 = vmatprep.subr.bf16.mxu0 0
        %1197 = vmatpush1.bf16.msra.mxu0 0
        %1198 = vmatprep.subr.bf16.mxu0 0
        %1199 = vmatpush1.bf16.msra.mxu0 0
        %1200 = vmatprep.subr.bf16.mxu0 0
        %1201 = vmatpush1.bf16.msra.mxu0 0
        %1202 = vmatprep.subr.bf16.mxu0 0
        %1203 = vmatpush1.bf16.msra.mxu0 0
        %1204 = vmatprep.subr.bf16.mxu0 0
        %1205 = vmatpush1.bf16.msra.mxu0 0
        %1206 = vmatprep.subr.bf16.mxu0 0
        %1207 = vmatpush1.bf16.msra.mxu0 0
        %1208 = vmatprep.subr.bf16.mxu0 0
        %1209 = vmatpush1.bf16.msra.mxu0 0
        %1210 = vmatprep.subr.bf16.mxu0 0
        %1211 = vmatpush1.bf16.msra.mxu0 0
        %1212 = vmatprep.subr.bf16.mxu0 0
        %1213 = vmatpush1.bf16.msra.mxu0 0
        %1214 = vmatprep.subr.bf16.mxu0 0
        %1215 = vmatpush1.bf16.msra.mxu0 0
        %1216 = vmatprep.subr.bf16.mxu0 0
        %1217 = vmatpush1.bf16.msra.mxu0 0
        %1218 = vmatprep.subr.bf16.mxu0 0
        %1219 = vmatpush1.bf16.msra.mxu0 0
        %1220 = vmatprep.subr.bf16.mxu0 0
        %1221 = vmatpush1.bf16.msra.mxu0 0
        %1222 = vmatprep.subr.bf16.mxu0 0
        %1223 = vmatpush1.bf16.msra.mxu0 0
        %1224 = vmatprep.subr.bf16.mxu0 0
        %1225 = vmatpush1.bf16.msra.mxu0 0
        %1226 = vmatprep.mubr.bf16.mxu0 0
        %1227 = vmatmul.mubr.bf16.gmra.mrb[0].mxu0 %v1189
        %v1228 = vpop.f32.mrb[0].mxu0
        %v1229 = vadd.f32 0.0, %v1228
        %v1230 = vpop.f32.mrb[0].mxu0
        %v1231 = vpop.f32.mrb[0].mxu0
        %v1232 = vpop.f32.mrb[0].mxu0
        %1233 = vdwg.mxu0
        %1234 = vrot.lane.b32.xlu0 %v889, 104
        %v1235 = vpop.permute.xlu0 %1234
        %1236 = vrot.lane.b32.xlu0 %v889, 72
        %v1237 = vpop.permute.xlu0 %1236
        %v1239 = vsel %vm893, %v1235, 0
        %v1242 = vsel %vm893, %v1237, 0
        %1244 = vmatprep.subr.bf16.mxu0 0
        %1245 = vmatpush1.bf16.xpose.msra.mxu0 %v1242
        %1246 = vmatprep.subr.bf16.mxu0 0
        %1247 = vmatpush1.bf16.xpose.msra.mxu0 0
        %1248 = vmatprep.subr.bf16.mxu0 0
        %1249 = vmatpush1.bf16.xpose.msra.mxu0 0
        %1250 = vmatprep.subr.bf16.mxu0 0
        %1251 = vmatpush1.bf16.xpose.msra.mxu0 0
        %1252 = vmatprep.subr.bf16.mxu0 0
        %1253 = vmatpush1.bf16.xpose.msra.mxu0 0
        %1254 = vmatprep.subr.bf16.mxu0 0
        %1255 = vmatpush1.bf16.xpose.msra.mxu0 0
        %1256 = vmatprep.subr.bf16.mxu0 0
        %1257 = vmatpush1.bf16.xpose.msra.mxu0 0
        %1258 = vmatprep.subr.bf16.mxu0 0
        %1259 = vmatpush1.bf16.xpose.msra.mxu0 0
        %1260 = vmatprep.subr.bf16.mxu0 0
        %1261 = vmatpush1.bf16.xpose.msra.mxu0 0
        %1262 = vmatprep.subr.bf16.mxu0 0
        %1263 = vmatpush1.bf16.xpose.msra.mxu0 0
        %1264 = vmatprep.subr.bf16.mxu0 0
        %1265 = vmatpush1.bf16.xpose.msra.mxu0 0
        %1266 = vmatprep.subr.bf16.mxu0 0
        %1267 = vmatpush1.bf16.xpose.msra.mxu0 0
        %1268 = vmatprep.subr.bf16.mxu0 0
        %1269 = vmatpush1.bf16.xpose.msra.mxu0 0
        %1270 = vmatprep.subr.bf16.mxu0 0
        %1271 = vmatpush1.bf16.xpose.msra.mxu0 0
        %1272 = vmatprep.subr.bf16.mxu0 0
        %1273 = vmatpush1.bf16.xpose.msra.mxu0 0
        %1274 = vmatprep.subr.bf16.mxu0 0
        %1275 = vmatpush1.bf16.xpose.msra.mxu0 0
        %1276 = vmatprep.mubr.bf16.mxu0 0
        %1277 = vmatmul.mubr.bf16.gmra.mrb[0].mxu0 %v1239
        %v1278 = vpop.f32.mrb[0].mxu0
        %v1279 = vadd.f32 0.0, %v1278
        %v1280 = vpop.f32.mrb[0].mxu0
        %v1281 = vpop.f32.mrb[0].mxu0
        %v1282 = vpop.f32.mrb[0].mxu0
        %1283 = vdwg.mxu0
        %v1284 = vmul.f32 %v1279, 0.35355338
        %v1285 = vsel %vm947, -1e+09, %v1284
        %v1286 = vsel %vm893, %v1285, -inf
        %1287 = vmax.xlane.f32.xlu0 %v1286
        %v1288 = vpop.xlane.xlu0 %1287
        %v1289 = vsub.f32 %v1285, %v1288
        %v1290 = vmul.f32 %v1289, 1.442695
        %v1291 = vpow.pop %v1290
        %v1292 = vsel %vm893, %v1291, 0.0
        %1293 = vadd.xlane.f32.xlu0 %v1292
        %v1294 = vpop.xlane.xlu0 %1293
        %v1295 = vrcp.pop %v1294
        %v1296 = vmul.f32 %v1291, %v1295
        %v1297 = vpack.c.bf16 %v1296, %v1296
        %1298 = vrot.lane.b32.xlu0 %v889, 40
        %v1299 = vpop.permute.xlu0 %1298
        %v1301 = vsel %vm893, %v1297, 0
        %v1304 = vsel %vm966, %v1299, 0
        %1306 = vmatprep.subr.bf16.mxu0 0
        %1307 = vmatpush1.bf16.msra.mxu0 %v1304
        %1308 = vmatprep.subr.bf16.mxu0 0
        %1309 = vmatpush1.bf16.msra.mxu0 0
        %1310 = vmatprep.subr.bf16.mxu0 0
        %1311 = vmatpush1.bf16.msra.mxu0 0
        %1312 = vmatprep.subr.bf16.mxu0 0
        %1313 = vmatpush1.bf16.msra.mxu0 0
        %1314 = vmatprep.subr.bf16.mxu0 0
        %1315 = vmatpush1.bf16.msra.mxu0 0
        %1316 = vmatprep.subr.bf16.mxu0 0
        %1317 = vmatpush1.bf16.msra.mxu0 0
        %1318 = vmatprep.subr.bf16.mxu0 0
        %1319 = vmatpush1.bf16.msra.mxu0 0
        %1320 = vmatprep.subr.bf16.mxu0 0
        %1321 = vmatpush1.bf16.msra.mxu0 0
        %1322 = vmatprep.subr.bf16.mxu0 0
        %1323 = vmatpush1.bf16.msra.mxu0 0
        %1324 = vmatprep.subr.bf16.mxu0 0
        %1325 = vmatpush1.bf16.msra.mxu0 0
        %1326 = vmatprep.subr.bf16.mxu0 0
        %1327 = vmatpush1.bf16.msra.mxu0 0
        %1328 = vmatprep.subr.bf16.mxu0 0
        %1329 = vmatpush1.bf16.msra.mxu0 0
        %1330 = vmatprep.subr.bf16.mxu0 0
        %1331 = vmatpush1.bf16.msra.mxu0 0
        %1332 = vmatprep.subr.bf16.mxu0 0
        %1333 = vmatpush1.bf16.msra.mxu0 0
        %1334 = vmatprep.subr.bf16.mxu0 0
        %1335 = vmatpush1.bf16.msra.mxu0 0
        %1336 = vmatprep.subr.bf16.mxu0 0
        %1337 = vmatpush1.bf16.msra.mxu0 0
        %1338 = vmatprep.mubr.bf16.mxu0 0
        %1339 = vmatmul.mubr.bf16.gmra.mrb[0].mxu0 %v1301
        %v1340 = vpop.f32.mrb[0].mxu0
        %v1341 = vadd.f32 0.0, %v1340
        %v1342 = vpop.f32.mrb[0].mxu0
        %v1343 = vpop.f32.mrb[0].mxu0
        %v1344 = vpop.f32.mrb[0].mxu0
        %1345 = vdwg.mxu0
        %1347 = vrot.lane.b32.xlu0 %v1117, 8
        %v1348 = vpop.permute.xlu0 %1347
        %1351 = vrot.lane.b32.xlu0 %v1229, 16
        %v1352 = vpop.permute.xlu0 %1351
        %1355 = vrot.lane.b32.xlu0 %v1341, 24
        %v1356 = vpop.permute.xlu0 %1355
        %v1358 = vsel %vm893, %v1005, %v1348
        %vm1359 = vcmask 130048
        %v1360 = vsel %vm1359, %v1358, %v1352
        %vm1361 = vcmask 195584
        %v1362 = vsel %vm1361, %v1360, %v1356
        %v1363 = vpack.c.bf16 %v1362, %v1362
        %v1365 = vlaneseq
        %v1366 = vshrl.u32 %v1365, 7
        %v1367 = vsub.s32 0, %v1366
        %v1368 = vrot.slane %v826, %v1367
        %v1374 = vunpack.c.l.b16 %v822
        %v1375 = vunpack.c.l.b16 %v823
        %v1376 = vunpack.c.l.b16 %v824
        %v1377 = vunpack.c.l.b16 %v825
        %v1378 = vpack.c.b16 %v1375, %v1374
        %v1379 = vpack.c.b16 %v1377, %v1376
        %v1383 = vsel %vm785, %v1363, 0
        %1385 = vmatprep.subr.bf16.mxu0 0
        %1386 = vmatpush1.bf16.msra.mxu0 %v1378
        %1387 = vmatprep.subr.bf16.mxu0 0
        %1388 = vmatpush1.bf16.msra.mxu0 %v1379
        %1389 = vmatprep.subr.bf16.mxu0 0
        %1390 = vmatpush1.bf16.msra.mxu0 0
        %1391 = vmatprep.subr.bf16.mxu0 0
        %1392 = vmatpush1.bf16.msra.mxu0 0
        %1393 = vmatprep.subr.bf16.mxu0 0
        %1394 = vmatpush1.bf16.msra.mxu0 0
        %1395 = vmatprep.subr.bf16.mxu0 0
        %1396 = vmatpush1.bf16.msra.mxu0 0
        %1397 = vmatprep.subr.bf16.mxu0 0
        %1398 = vmatpush1.bf16.msra.mxu0 0
        %1399 = vmatprep.subr.bf16.mxu0 0
        %1400 = vmatpush1.bf16.msra.mxu0 0
        %1401 = vmatprep.subr.bf16.mxu0 0
        %1402 = vmatpush1.bf16.msra.mxu0 0
        %1403 = vmatprep.subr.bf16.mxu0 0
        %1404 = vmatpush1.bf16.msra.mxu0 0
        %1405 = vmatprep.subr.bf16.mxu0 0
        %1406 = vmatpush1.bf16.msra.mxu0 0
        %1407 = vmatprep.subr.bf16.mxu0 0
        %1408 = vmatpush1.bf16.msra.mxu0 0
        %1409 = vmatprep.subr.bf16.mxu0 0
        %1410 = vmatpush1.bf16.msra.mxu0 0
        %1411 = vmatprep.subr.bf16.mxu0 0
        %1412 = vmatpush1.bf16.msra.mxu0 0
        %1413 = vmatprep.subr.bf16.mxu0 0
        %1414 = vmatpush1.bf16.msra.mxu0 0
        %1415 = vmatprep.subr.bf16.mxu0 0
        %1416 = vmatpush1.bf16.msra.mxu0 0
        %1417 = vmatprep.mubr.bf16.mxu0 0
        %1418 = vmatmul.mubr.bf16.gmra.mrb[0].mxu0 %v1383
        %v1419 = vpop.f32.mrb[0].mxu0
        %v1420 = vadd.f32 %v1368, %v1419
        %v1421 = vpop.f32.mrb[0].mxu0
        %v1422 = vpop.f32.mrb[0].mxu0
        %v1423 = vpop.f32.mrb[0].mxu0
        %1424 = vdwg.mxu0
        %v1425 = vadd.f32 %v781, %v1420
        %v1426 = vsel %vm785, %v1425, 0.0
        %1427 = vadd.xlane.f32.xlu0 %v1426
        %v1428 = vpop.xlane.xlu0 %1427
        %v1429 = vmul.f32 %v1428, %v789
        %v1430 = vsub.f32 %v1425, %v1429
        %v1431 = vmul.f32 %v1430, %v1430
        %v1432 = vsel %vm785, %v1431, 0.0
        %1433 = vadd.xlane.f32.xlu0 %v1432
        %v1434 = vpop.xlane.xlu0 %1433
        %v1435 = vmul.f32 %v1434, 0.032258064
        %v1436 = vrsqrt.pop %v1435
        %v1437 = vmul.f32 %v1435, %v1436
        %vm1438 = vcmp.eq.f32.partialorder %v1435, inf
        %v1439 = vsel %vm1438, %v1435, %v1437
        %vm1440 = vcmp.eq.f32.partialorder %v1435, 0.0
        %v1441 = vand.u32 %v1435, 2147483648
        %v1442 = vsel %vm1440, %v1441, %v1439
        %v1443 = vlaneseq
        %v1444 = vshrl.u32 %v1443, 7
        %v1445 = vsub.s32 1, %v1444
        %v1446 = vrot.slane %v783, %v1445
        %v1447 = vmul.f32 %v1446, %v1430
        %v1448 = vadd.f32 %v1442, 1e-06
        %v1449 = vrcp.pop %v1448
        %v1450 = vmul.f32 %v1447, %v1449
        %v1451 = vlaneseq
        %v1452 = vshrl.u32 %v1451, 7
        %v1453 = vsub.s32 1, %v1452
        %v1454 = vrot.slane %v784, %v1453
        %v1455 = vadd.f32 %v1450, %v1454
        %v1456 = vpack.c.bf16 %v1455, %v1455
        %v1457 = vld [vmem:[%s764] sm:$0xf]
        %v1458 = vld [vmem:[%s764 + $0x4] sm:$0xf]
        %v1459 = vld [vmem:[%s764 + $0x8] sm:$0xf]
        %v1460 = vld [vmem:[%s764 + $0xc] sm:$0xf]
        %v1461 = vld [vmem:[%s653] sm:$0x1]
        %v1463 = vlaneseq
        %v1464 = vshrl.u32 %v1463, 7
        %v1465 = vsub.s32 0, %v1464
        %v1466 = vrot.slane %v1461, %v1465
        %v1472 = vunpack.c.l.b16 %v1457
        %v1473 = vunpack.c.l.b16 %v1458
        %v1474 = vunpack.c.l.b16 %v1459
        %v1475 = vunpack.c.l.b16 %v1460
        %v1476 = vpack.c.b16 %v1473, %v1472
        %v1477 = vpack.c.b16 %v1475, %v1474
        %v1481 = vsel %vm785, %v1456, 0
        %1483 = vmatprep.subr.bf16.mxu0 0
        %1484 = vmatpush1.bf16.msra.mxu0 %v1476
        %1485 = vmatprep.subr.bf16.mxu0 0
        %1486 = vmatpush1.bf16.msra.mxu0 %v1477
        %1487 = vmatprep.subr.bf16.mxu0 0
        %1488 = vmatpush1.bf16.msra.mxu0 0
        %1489 = vmatprep.subr.bf16.mxu0 0
        %1490 = vmatpush1.bf16.msra.mxu0 0
        %1491 = vmatprep.subr.bf16.mxu0 0
        %1492 = vmatpush1.bf16.msra.mxu0 0
        %1493 = vmatprep.subr.bf16.mxu0 0
        %1494 = vmatpush1.bf16.msra.mxu0 0
        %1495 = vmatprep.subr.bf16.mxu0 0
        %1496 = vmatpush1.bf16.msra.mxu0 0
        %1497 = vmatprep.subr.bf16.mxu0 0
        %1498 = vmatpush1.bf16.msra.mxu0 0
        %1499 = vmatprep.subr.bf16.mxu0 0
        %1500 = vmatpush1.bf16.msra.mxu0 0
        %1501 = vmatprep.subr.bf16.mxu0 0
        %1502 = vmatpush1.bf16.msra.mxu0 0
        %1503 = vmatprep.subr.bf16.mxu0 0
        %1504 = vmatpush1.bf16.msra.mxu0 0
        %1505 = vmatprep.subr.bf16.mxu0 0
        %1506 = vmatpush1.bf16.msra.mxu0 0
        %1507 = vmatprep.subr.bf16.mxu0 0
        %1508 = vmatpush1.bf16.msra.mxu0 0
        %1509 = vmatprep.subr.bf16.mxu0 0
        %1510 = vmatpush1.bf16.msra.mxu0 0
        %1511 = vmatprep.subr.bf16.mxu0 0
        %1512 = vmatpush1.bf16.msra.mxu0 0
        %1513 = vmatprep.subr.bf16.mxu0 0
        %1514 = vmatpush1.bf16.msra.mxu0 0
        %1515 = vmatprep.mubr.bf16.mxu0 0
        %1516 = vmatmul.mubr.bf16.gmra.mrb[0].mxu0 %v1481
        %v1517 = vpop.f32.mrb[0].mxu0
        %v1518 = vadd.f32 %v1466, %v1517
        %v1519 = vpop.f32.mrb[0].mxu0
        %v1520 = vpop.f32.mrb[0].mxu0
        %v1521 = vpop.f32.mrb[0].mxu0
        %1522 = vdwg.mxu0
        %v1523 = vmax.f32 %v1518, 0.0
        %v1524 = vpack.c.bf16 %v1523, %v1523
        %v1525 = vld [vmem:[%s769] sm:$0xf]
        %v1526 = vld [vmem:[%s769 + $0x4] sm:$0xf]
        %v1527 = vld [vmem:[%s769 + $0x8] sm:$0xf]
        %v1528 = vld [vmem:[%s769 + $0xc] sm:$0xf]
        %v1529 = vld [vmem:[%s769 + $0x10] sm:$0xf]
        %v1530 = vld [vmem:[%s769 + $0x14] sm:$0xf]
        %v1531 = vld [vmem:[%s769 + $0x18] sm:$0xf]
        %v1532 = vld [vmem:[%s769 + $0x1c] sm:$0xf]
        %v1541 = vunpack.c.l.b16 %v1525
        %v1542 = vunpack.c.l.b16 %v1526
        %v1543 = vunpack.c.l.b16 %v1527
        %v1544 = vunpack.c.l.b16 %v1528
        %v1545 = vunpack.c.l.b16 %v1529
        %v1546 = vunpack.c.l.b16 %v1530
        %v1547 = vunpack.c.l.b16 %v1531
        %v1548 = vunpack.c.l.b16 %v1532
        %v1549 = vpack.c.b16 %v1542, %v1541
        %v1550 = vpack.c.b16 %v1544, %v1543
        %v1551 = vpack.c.b16 %v1546, %v1545
        %v1552 = vpack.c.b16 %v1548, %v1547
        %vm1557 = vcmask 523264
        %v1559 = vsel %vm1557, %v1524, 0
        %1561 = vmatprep.subr.bf16.mxu0 0
        %1562 = vmatpush1.bf16.msra.mxu0 %v1549
        %1563 = vmatprep.subr.bf16.mxu0 0
        %1564 = vmatpush1.bf16.msra.mxu0 %v1550
        %1565 = vmatprep.subr.bf16.mxu0 0
        %1566 = vmatpush1.bf16.msra.mxu0 %v1551
        %1567 = vmatprep.subr.bf16.mxu0 0
        %1568 = vmatpush1.bf16.msra.mxu0 %v1552
        %1569 = vmatprep.subr.bf16.mxu0 0
        %1570 = vmatpush1.bf16.msra.mxu0 0
        %1571 = vmatprep.subr.bf16.mxu0 0
        %1572 = vmatpush1.bf16.msra.mxu0 0
        %1573 = vmatprep.subr.bf16.mxu0 0
        %1574 = vmatpush1.bf16.msra.mxu0 0
        %1575 = vmatprep.subr.bf16.mxu0 0
        %1576 = vmatpush1.bf16.msra.mxu0 0
        %1577 = vmatprep.subr.bf16.mxu0 0
        %1578 = vmatpush1.bf16.msra.mxu0 0
        %1579 = vmatprep.subr.bf16.mxu0 0
        %1580 = vmatpush1.bf16.msra.mxu0 0
        %1581 = vmatprep.subr.bf16.mxu0 0
        %1582 = vmatpush1.bf16.msra.mxu0 0
        %1583 = vmatprep.subr.bf16.mxu0 0
        %1584 = vmatpush1.bf16.msra.mxu0 0
        %1585 = vmatprep.subr.bf16.mxu0 0
        %1586 = vmatpush1.bf16.msra.mxu0 0
        %1587 = vmatprep.subr.bf16.mxu0 0
        %1588 = vmatpush1.bf16.msra.mxu0 0
        %1589 = vmatprep.subr.bf16.mxu0 0
        %1590 = vmatpush1.bf16.msra.mxu0 0
        %1591 = vmatprep.subr.bf16.mxu0 0
        %1592 = vmatpush1.bf16.msra.mxu0 0
        %1593 = vmatprep.mubr.bf16.mxu0 0
        %1594 = vmatmul.mubr.bf16.gmra.mrb[0].mxu0 %v1559
        %v1595 = vpop.f32.mrb[0].mxu0
        %v1596 = vadd.f32 0.0, %v1595
        %v1597 = vpop.f32.mrb[0].mxu0
        %v1598 = vpop.f32.mrb[0].mxu0
        %v1599 = vpop.f32.mrb[0].mxu0
        %1600 = vdwg.mxu0
        %v1601 = vadd.f32 %v1425, %v1596
        %v1602 = vld [vmem:[%s772] sm:$0x1]
        %v1604 = vlaneseq
        %v1605 = vshrl.u32 %v1604, 7
        %v1606 = vsub.s32 0, %v1605
        %v1607 = vrot.slane %v1602, %v1606
        %v1609 = vadd.f32 %v1601, %v1607
        %1610 = vst.msk [vmem:[#allocation2] sm:$0xff] %vm785, %v1609
        %p1611 = scmp.eq.s32.totalorder %s45, 1
        // Predicated region
        $region105: #{tpu_custom_call.1} parent=75 // pred_check
          %p1612 = pneg %p1611
        $region106: #{tpu_custom_call.1} parent=75 // pred_check_branch
          %1614 = sbr.rel (%p1612) target = $region108
        $region107: #{tpu_custom_call.1} parent=75 // pred_region
          %v1615 = vld [vmem:[%s12] sm:$0x1]
          %v1616 = vld [vmem:[%s13] sm:$0x1]
          %v1617 = vsel %vm785, %v1609, 0.0
          %1618 = vadd.xlane.f32.xlu0 %v1617
          %v1619 = vpop.xlane.xlu0 %1618
          %v1620 = vmul.f32 %v1619, %v789
          %v1621 = vsub.f32 %v1609, %v1620
          %v1622 = vmul.f32 %v1621, %v1621
          %v1623 = vsel %vm785, %v1622, 0.0
          %1624 = vadd.xlane.f32.xlu0 %v1623
          %v1625 = vpop.xlane.xlu0 %1624
          %v1626 = vmul.f32 %v1625, 0.032258064
          %v1627 = vrsqrt.pop %v1626
          %v1628 = vmul.f32 %v1626, %v1627
          %vm1629 = vcmp.eq.f32.partialorder %v1626, inf
          %v1630 = vsel %vm1629, %v1626, %v1628
          %vm1631 = vcmp.eq.f32.partialorder %v1626, 0.0
          %v1632 = vand.u32 %v1626, 2147483648
          %v1633 = vsel %vm1631, %v1632, %v1630
          %v1635 = vlaneseq
          %v1636 = vshrl.u32 %v1635, 7
          %v1637 = vsub.s32 0, %v1636
          %v1638 = vrot.slane %v1615, %v1637
          %v1640 = vmul.f32 %v1638, %v1621
          %v1641 = vadd.f32 %v1633, 1e-06
          %v1642 = vrcp.pop %v1641
          %v1643 = vmul.f32 %v1640, %v1642
          %v1645 = vlaneseq
          %v1646 = vshrl.u32 %v1645, 7
          %v1647 = vsub.s32 0, %v1646
          %v1648 = vrot.slane %v1616, %v1647
          %v1650 = vadd.f32 %v1643, %v1648
          %1651 = vst.msk [vmem:[%s745] sm:$0xff] %vm785, %v1650
        $region108: #{tpu_custom_call.1} parent=75 // pred_fallthru
          _
        %s1652 = sand.u32 %s414, 1
        %s1653 = scalar_lea.sflag [#allocation5], %s1652
        %s1654 = sand.u32 %s414, 1
        %s1655 = smul.addr %s1654, 8
        %s1656 = scalar_lea.vmem [#allocation14], %s1655
        // Predicated region
        $region109: #{tpu_custom_call.1} parent=75 // pred_check
          %p1657 = pneg %p424
        $region110: #{tpu_custom_call.1} parent=75 // pred_check_branch
          %1659 = sbr.rel (%p1657) target = $region112
        $region111: #{tpu_custom_call.1} parent=75 // pred_region
          %s1661 = ssub.s32 128, 128
          %1662 = vsyncadd %s1653, %s1661
          %s1663 = smul.addr %s44, 128
          %s1664 = scalar_lea.hbm %s14, %s1663
          %s1666 = sshll.u32 %s1656, 4
          %s1667 = int_to_ptr.vmem [resolvable:$true] %s1666
          %1669 = dma.vmem_to_hbm [thread:$0]  %s1667, 128, %s1664, %s1653
        $region112: #{tpu_custom_call.1} parent=75 // pred_fallthru
          _
      $region76: #{tpu_custom_call.1} parent=5 // pred_fallthru
        _
      %p1670 = scmp.le.s32.totalorder 2, %s35
      // Predicated region
      $region113: #{tpu_custom_call.1} parent=5 // pred_check
        %p1671 = pneg %p1670
      $region114: #{tpu_custom_call.1} parent=5 // pred_check_branch
        %1673 = sbr.rel (%p1671) target = $region116
      $region115: #{tpu_custom_call.1} parent=5 // pred_region
        %s1674 = ssub.s32 %s35, 2
        // Predicated region
        $region117: #{tpu_custom_call.1} parent=115 // pred_check
          %p1675 = pneg %p430
        $region118: #{tpu_custom_call.1} parent=115 // pred_check_branch
          %1677 = sbr.rel (%p1675) target = $region120
        $region119: #{tpu_custom_call.1} parent=115 // pred_region
          %s1678 = sand.u32 %s415, 1
          %s1679 = scalar_lea.sflag [#allocation5], %s1678
          %s1680 = sand.u32 %s415, 1
          %s1681 = smul.addr %s1680, 8
          %s1682 = scalar_lea.vmem [#allocation14], %s1681
          %1683 = dma.done %s1679, 128
        $region120: #{tpu_custom_call.1} parent=115 // pred_fallthru
          _
      $region116: #{tpu_custom_call.1} parent=5 // pred_fallthru
        _
    $region6: #{tpu_custom_call.1} parent=1 // loop_footer
      %s39 = sadd.s32 1, %s35
    $region7: #{tpu_custom_call.1} parent=1 // loop_footer_branch
      %34 = sbr.rel target = $region3
    $region8: #{tpu_custom_call.1} parent=1 // loop_exit
      _
    %1684 = vsyncpa [#allocation4], 1
    %s1685 = scalar_lea.sflag [#allocation4], 1
    %1686 = vsyncpa %s1685, 1
    %1687 = vsyncpa [#allocation7], 1
    %s1688 = scalar_lea.sflag [#allocation7], 1
    %1689 = vsyncpa %s1688, 1
    %1690 = vsyncpa [#allocation10], 1
    %s1691 = scalar_lea.sflag [#allocation10], 1
    %1692 = vsyncpa %s1691, 1
    %1693 = vsyncpa [#allocation13], 1
    %s1694 = scalar_lea.sflag [#allocation13], 1
    %1695 = vsyncpa %s1694, 1
    %1696 = vsyncpa [#allocation5], 1
    %s1697 = scalar_lea.sflag [#allocation5], 1
    %1698 = vsyncpa %s1697, 1

</llo_original>
